<compile_context>
chip_gen: v7x
topology: tpu7x:2x2x1
jax: 0.10.0
libtpu: 0.0.40
codegen_flags: <defaults>
</compile_context>

<pallas_src>
import jax
import jax.numpy as jnp
from jax.experimental import pallas as pl
from jax.experimental.pallas import tpu as pltpu

# ------------------------- static configuration -------------------------
ACTIVATION = "tanh"               # F.tanh
LAYERS = 2
WIDTH = 32
NUM_FEATURES = 16                 # stand-in for dataset.num_features
NUM_CLASSES = 2                   # NCI1 has 2 classes
GIN_EPS = 0.0                     # GINConv default eps
BN_EPS = 1e-5                     # BatchNorm1d default eps
NEG_INF = -1e30
NODES_PER_GRAPH = 16              # example graphs all have equal node count

# TODO(synk): RANDOM_RATIO / ADDITIONAL_RANDOM_FEATURES branches use
# torch.empty (uninitialized memory) + random init; with the chosen config
# (both zero) they are never taken, so they are not implemented.


# ------------------------- in-kernel math helpers -------------------------
def _act(x):
    # ACTIVATION from the module: tanh (elu branch kept for completeness)
    if ACTIVATION == "elu":
        return jnp.where(x > 0, x, jnp.exp(x) - 1.0)
    return jnp.tanh(x)


def _elu(x):
    return jnp.where(x > 0, x, jnp.exp(x) - 1.0)


def _mxu_dot(a, b):
    """bf16 MXU matmul with f32 accumulation (no-op cast if already bf16)."""
    return jnp.dot(a.astype(jnp.bfloat16), b.astype(jnp.bfloat16),
                   preferred_element_type=jnp.float32)


def _gin_block(adj, x, w1, b1, w2, b2):
    """GINConv(SimpleMLP) + activation on one graph block, all in VMEM.

    out = act( MLP( (1+eps)*x + A @ x ) )
    MLP = Linear -> BN(eval, folded) -> ReLU -> Linear -> BN -> ReLU
    """
    agg = _mxu_dot(adj, x)                         # [n, fin]  f32 accumulate
    h = (1.0 + GIN_EPS) * x + agg                  # f32 elementwise
    z1 = jnp.maximum(_mxu_dot(h, w1) + b1, 0.0)    # Linear + folded BN + ReLU
    z2 = jnp.maximum(_mxu_dot(z1, w2) + b2, 0.0)
    return _act(z2)


# ------------------------- fused forward kernel -------------------------
def _net_kernel(adj_ref, x_ref, mask_ref, *rest):
    o_ref = rest[-1]
    p = rest[:-1]                     # flat param refs (all 2D)

    adj = adj_ref[0]                  # [NPG, NPG] bf16 (diag block of A)
    h = x_ref[0]                      # [NPG, F]   f32
    valid = mask_ref[0]               # [NPG, 1]   f32 valid-node mask

    # conv1, conv2, then LAYERS extra GIN layers — chained in VMEM/registers.
    idx = 0
    for _ in range(2 + LAYERS):
        w1, b1 = p[idx][...], p[idx + 1][...]
        w2, b2 = p[idx + 2][...], p[idx + 3][...]
        idx += 4
        h = _gin_block(adj, h, w1, b1, w2, b2)

    # scatter_max over the graph: one vectorized masked max over nodes.
    pooled = jnp.max(jnp.where(valid > 0.5, h, NEG_INF),
                     axis=0, keepdims=True)                     # [1, WIDTH]
    # Guard for empty graphs (torch_scatter fills missing rows with 0).
    count = jnp.sum(valid, axis=0, keepdims=True)               # [1, 1]
    pooled = jnp.where(count > 0.5, pooled, 0.0)

    f1w, f1b = p[idx][...], p[idx + 1][...]
    f2w, f2b = p[idx + 2][...], p[idx + 3][...]
    f3w, f3b = p[idx + 4][...], p[idx + 5][...]

    h1 = _elu(_mxu_dot(pooled, f1w) + f1b)
    # F.dropout(p=0.5, training=False) -> identity
    h2 = _elu(_mxu_dot(h1, f2w) + f2b)
    logits = _mxu_dot(h2, f3w) + f3b                            # [1, C]

    m = jnp.max(logits, axis=1, keepdims=True)
    lse = m + jnp.log(jnp.sum(jnp.exp(logits - m), axis=1, keepdims=True))
    o_ref[0] = (logits - lse).astype(o_ref.dtype)


# ------------------------- wrapper (single pallas_call) -------------------------
def _flatten_params(params):
    flat = []
    flat += list(params["conv1"])
    flat += list(params["conv2"])
    for l in range(LAYERS):
        flat += list(params["layers"][l])
    flat += list(params["fc1"])
    flat += list(params["fc2"])
    flat += list(params["fc3"])
    return flat


def net_forward(params, adj_blocks, x_blocks, mask_blocks):
    num_graphs, npg, _ = adj_blocks.shape
    nf = x_blocks.shape[-1]
    flat = _flatten_params(params)

    # Weights are small and constant across the grid: constant block index
    # means they are DMA'd into VMEM once and reused every grid step.
    weight_specs = [pl.BlockSpec(w.shape, lambda g: (0, 0)) for w in flat]

    in_specs = [
        pl.BlockSpec((1, npg, npg), lambda g: (g, 0, 0)),   # adj diag block
        pl.BlockSpec((1, npg, nf),  lambda g: (g, 0, 0)),   # node features
        pl.BlockSpec((1, npg, 1),   lambda g: (g, 0, 0)),   # valid-node mask
    ] + weight_specs
    out_spec = pl.BlockSpec((1, 1, NUM_CLASSES), lambda g: (g, 0, 0))

    out = pl.pallas_call(
        _net_kernel,
        out_shape=jax.ShapeDtypeStruct((num_graphs, 1, NUM_CLASSES),
                                       jnp.float32),
        grid=(num_graphs,),
        in_specs=in_specs,
        out_specs=out_spec,
        compiler_params=pltpu.CompilerParams(
            dimension_semantics=("parallel",)),
    )(adj_blocks, x_blocks, mask_blocks, *flat)
    return out.reshape(num_graphs, NUM_CLASSES)


# ------------------------- parameter setup (plain JAX glue) -------------------------
def _make_gin_params(key, fin, fout):
    """SimpleMLP(fin, 3*fin, fout) with eval-mode BatchNorm folded in."""
    hidden = 3 * fin
    k1, k2, k3, k4 = jax.random.split(key, 4)
    w1 = 0.1 * jax.random.normal(k1, (fin, hidden), jnp.float32)
    b1 = 0.01 * jax.random.normal(k2, (1, hidden), jnp.float32)
    w2 = 0.1 * jax.random.normal(k3, (hidden, fout), jnp.float32)
    b2 = 0.01 * jax.random.normal(k4, (1, fout), jnp.float32)
    # Fresh BatchNorm1d in eval mode: gamma=1, beta=0, mean=0, var=1.
    # TODO(synk): with trained running stats the fold must be per-channel,
    # not a single scalar; fine for this synthetic setup.
    s = 1.0 / jnp.sqrt(1.0 + BN_EPS)
    # Weights stored bf16 (MXU operands, half the DMA bytes); biases stay f32.
    return ((w1 * s).astype(jnp.bfloat16), (b1 * s),
            (w2 * s).astype(jnp.bfloat16), (b2 * s))


def _make_linear_params(key, fin, fout):
    k1, k2 = jax.random.split(key, 2)
    w = 0.1 * jax.random.normal(k1, (fin, fout), jnp.float32)
    b = 0.01 * jax.random.normal(k2, (1, fout), jnp.float32)
    return w.astype(jnp.bfloat16), b


def make_net_params(key):
    keys = jax.random.split(key, 3 + LAYERS + 3)
    return {
        "conv1": _make_gin_params(keys[0], NUM_FEATURES, 32),
        "conv2": _make_gin_params(keys[1], 32, WIDTH),
        "layers": [_make_gin_params(keys[2 + l], WIDTH, WIDTH)
                   for l in range(LAYERS)],
        "fc1": _make_linear_params(keys[2 + LAYERS], WIDTH, WIDTH),
        "fc2": _make_linear_params(keys[3 + LAYERS], WIDTH, 32),
        "fc3": _make_linear_params(keys[4 + LAYERS], 32, NUM_CLASSES),
    }


# ------------------------- example data -------------------------
def build_example(key):
    num_graphs = 2
    npg = NODES_PER_GRAPH
    n = npg * num_graphs

    x = jax.random.normal(key, (n, NUM_FEATURES), jnp.float32)

    # Deterministic bidirectional ring within each graph.
    idx = jnp.arange(npg)
    src_list, dst_list = [], []
    for g in range(num_graphs):
        off = g * npg
        src_list += [off + idx, off + (idx + 1) % npg]
        dst_list += [off + (idx + 1) % npg, off + idx]
    src = jnp.concatenate(src_list)
    dst = jnp.concatenate(dst_list)
    edge_index = jnp.stack([src, dst], axis=0)               # [2, E]
    batch = jnp.repeat(jnp.arange(num_graphs), npg)          # [N]

    # dense adjacency: adj[dst, src] counts edges src -> dst
    adj = jnp.zeros((n, n), jnp.float32).at[dst, src].add(1.0)

    # Per-graph block-diagonal layout: the forward is independent per graph,
    # so each grid step only needs its own diagonal adj block (bf16, exact
    # for small integer edge counts).
    adj_blocks = jnp.stack(
        [adj[g * npg:(g + 1) * npg, g * npg:(g + 1) * npg]
         for g in range(num_graphs)], axis=0).astype(jnp.bfloat16)
    x_blocks = x.reshape(num_graphs, npg, NUM_FEATURES)
    mask_blocks = jnp.ones((num_graphs, npg, 1), jnp.float32)  # all nodes valid
    return x, edge_index, batch, adj_blocks, x_blocks, mask_blocks


if __name__ == "__main__":
    key = jax.random.PRNGKey(0)
    kx, kp = jax.random.split(key)
    x, edge_index, batch, adj_blocks, x_blocks, mask_blocks = build_example(kx)
    params = make_net_params(kp)

    out = net_forward(params, adj_blocks, x_blocks, mask_blocks)
    out = jax.block_until_ready(out)

    assert out.shape == (adj_blocks.shape[0], NUM_CLASSES)
    assert bool(jnp.all(jnp.isfinite(out)))
    # log_softmax rows should sum to ~1 in prob space
    probs = jnp.exp(out).sum(axis=1)
    assert bool(jnp.all(jnp.abs(probs - 1.0) < 1e-4))
    print("KERNEL_OK")
</pallas_src>

<mosaic_0001>
module attributes {stable_mosaic.version = 11 : i64} {
  func.func @_net_kernel(%arg0: i32, %arg1: memref<1x16x16xbf16, #tpu.memory_space<vmem>>, %arg2: memref<1x16x16xf32, #tpu.memory_space<vmem>>, %arg3: memref<1x16x1xf32, #tpu.memory_space<vmem>>, %arg4: memref<16x48xbf16, #tpu.memory_space<vmem>>, %arg5: memref<1x48xf32, #tpu.memory_space<vmem>>, %arg6: memref<48x32xbf16, #tpu.memory_space<vmem>>, %arg7: memref<1x32xf32, #tpu.memory_space<vmem>>, %arg8: memref<32x96xbf16, #tpu.memory_space<vmem>>, %arg9: memref<1x96xf32, #tpu.memory_space<vmem>>, %arg10: memref<96x32xbf16, #tpu.memory_space<vmem>>, %arg11: memref<1x32xf32, #tpu.memory_space<vmem>>, %arg12: memref<32x96xbf16, #tpu.memory_space<vmem>>, %arg13: memref<1x96xf32, #tpu.memory_space<vmem>>, %arg14: memref<96x32xbf16, #tpu.memory_space<vmem>>, %arg15: memref<1x32xf32, #tpu.memory_space<vmem>>, %arg16: memref<32x96xbf16, #tpu.memory_space<vmem>>, %arg17: memref<1x96xf32, #tpu.memory_space<vmem>>, %arg18: memref<96x32xbf16, #tpu.memory_space<vmem>>, %arg19: memref<1x32xf32, #tpu.memory_space<vmem>>, %arg20: memref<32x32xbf16, #tpu.memory_space<vmem>>, %arg21: memref<1x32xf32, #tpu.memory_space<vmem>>, %arg22: memref<32x32xbf16, #tpu.memory_space<vmem>>, %arg23: memref<1x32xf32, #tpu.memory_space<vmem>>, %arg24: memref<32x2xbf16, #tpu.memory_space<vmem>>, %arg25: memref<1x2xf32, #tpu.memory_space<vmem>>, %arg26: memref<1x1x2xf32, #tpu.memory_space<vmem>>) attributes {dimension_semantics = [#tpu.dimension_semantics<parallel>], iteration_bounds = array<i64: 2>, scalar_prefetch = 0 : i64, scratch_operands = 0 : i64, tpu.core_type = #tpu.core_type<tc>, window_params = [{transform_indices = @transform_0, window_bounds = array<i64: 1, 16, 16>}, {transform_indices = @transform_1, window_bounds = array<i64: 1, 16, 16>}, {transform_indices = @transform_2, window_bounds = array<i64: 1, 16, 1>}, {pipeline_mode = #tpu.pipeline_mode<synchronous>, transform_indices = @transform_3, window_bounds = array<i64: 16, 48>}, {pipeline_mode = #tpu.pipeline_mode<synchronous>, transform_indices = @transform_4, window_bounds = array<i64: 1, 48>}, {pipeline_mode = #tpu.pipeline_mode<synchronous>, transform_indices = @transform_5, window_bounds = array<i64: 48, 32>}, {pipeline_mode = #tpu.pipeline_mode<synchronous>, transform_indices = @transform_6, window_bounds = array<i64: 1, 32>}, {pipeline_mode = #tpu.pipeline_mode<synchronous>, transform_indices = @transform_7, window_bounds = array<i64: 32, 96>}, {pipeline_mode = #tpu.pipeline_mode<synchronous>, transform_indices = @transform_8, window_bounds = array<i64: 1, 96>}, {pipeline_mode = #tpu.pipeline_mode<synchronous>, transform_indices = @transform_9, window_bounds = array<i64: 96, 32>}, {pipeline_mode = #tpu.pipeline_mode<synchronous>, transform_indices = @transform_10, window_bounds = array<i64: 1, 32>}, {pipeline_mode = #tpu.pipeline_mode<synchronous>, transform_indices = @transform_11, window_bounds = array<i64: 32, 96>}, {pipeline_mode = #tpu.pipeline_mode<synchronous>, transform_indices = @transform_12, window_bounds = array<i64: 1, 96>}, {pipeline_mode = #tpu.pipeline_mode<synchronous>, transform_indices = @transform_13, window_bounds = array<i64: 96, 32>}, {pipeline_mode = #tpu.pipeline_mode<synchronous>, transform_indices = @transform_14, window_bounds = array<i64: 1, 32>}, {pipeline_mode = #tpu.pipeline_mode<synchronous>, transform_indices = @transform_15, window_bounds = array<i64: 32, 96>}, {pipeline_mode = #tpu.pipeline_mode<synchronous>, transform_indices = @transform_16, window_bounds = array<i64: 1, 96>}, {pipeline_mode = #tpu.pipeline_mode<synchronous>, transform_indices = @transform_17, window_bounds = array<i64: 96, 32>}, {pipeline_mode = #tpu.pipeline_mode<synchronous>, transform_indices = @transform_18, window_bounds = array<i64: 1, 32>}, {pipeline_mode = #tpu.pipeline_mode<synchronous>, transform_indices = @transform_19, window_bounds = array<i64: 32, 32>}, {pipeline_mode = #tpu.pipeline_mode<synchronous>, transform_indices = @transform_20, window_bounds = array<i64: 1, 32>}, {pipeline_mode = #tpu.pipeline_mode<synchronous>, transform_indices = @transform_21, window_bounds = array<i64: 32, 32>}, {pipeline_mode = #tpu.pipeline_mode<synchronous>, transform_indices = @transform_22, window_bounds = array<i64: 1, 32>}, {pipeline_mode = #tpu.pipeline_mode<synchronous>, transform_indices = @transform_23, window_bounds = array<i64: 32, 2>}, {pipeline_mode = #tpu.pipeline_mode<synchronous>, transform_indices = @transform_24, window_bounds = array<i64: 1, 2>}, {transform_indices = @transform_25, window_bounds = array<i64: 1, 1, 2>}]} {
    %c0 = arith.constant 0 : index
    %c0_0 = arith.constant 0 : index
    %c0_1 = arith.constant 0 : index
    %0 = vector.load %arg1[%c0, %c0_0, %c0_1] : memref<1x16x16xbf16, #tpu.memory_space<vmem>>, vector<1x16x16xbf16>
    %1 = vector.shape_cast %0 : vector<1x16x16xbf16> to vector<16x16xbf16>
    %c0_2 = arith.constant 0 : index
    %c0_3 = arith.constant 0 : index
    %c0_4 = arith.constant 0 : index
    %2 = vector.load %arg2[%c0_2, %c0_3, %c0_4] : memref<1x16x16xf32, #tpu.memory_space<vmem>>, vector<1x16x16xf32>
    %3 = vector.shape_cast %2 : vector<1x16x16xf32> to vector<16x16xf32>
    %c0_5 = arith.constant 0 : index
    %c0_6 = arith.constant 0 : index
    %c0_7 = arith.constant 0 : index
    %4 = vector.load %arg3[%c0_5, %c0_6, %c0_7] : memref<1x16x1xf32, #tpu.memory_space<vmem>>, vector<1x16x1xf32>
    %5 = vector.shape_cast %4 : vector<1x16x1xf32> to vector<16x1xf32>
    %c0_8 = arith.constant 0 : index
    %c0_9 = arith.constant 0 : index
    %6 = vector.load %arg4[%c0_8, %c0_9] : memref<16x48xbf16, #tpu.memory_space<vmem>>, vector<16x48xbf16>
    %c0_10 = arith.constant 0 : index
    %c0_11 = arith.constant 0 : index
    %7 = vector.load %arg5[%c0_10, %c0_11] : memref<1x48xf32, #tpu.memory_space<vmem>>, vector<1x48xf32>
    %c0_12 = arith.constant 0 : index
    %c0_13 = arith.constant 0 : index
    %8 = vector.load %arg6[%c0_12, %c0_13] : memref<48x32xbf16, #tpu.memory_space<vmem>>, vector<48x32xbf16>
    %c0_14 = arith.constant 0 : index
    %c0_15 = arith.constant 0 : index
    %9 = vector.load %arg7[%c0_14, %c0_15] : memref<1x32xf32, #tpu.memory_space<vmem>>, vector<1x32xf32>
    %10 = arith.truncf %3 : vector<16x16xf32> to vector<16x16xbf16>
    %cst = arith.constant dense<0.000000e+00> : vector<16x16xf32>
    %11 = tpu.matmul %1, %10, %cst {dimension_numbers = #tpu.dot_dimension_numbers<[1], [0], [0], [1], [0, 0, 1, 1], [], []>} : vector<16x16xbf16>, vector<16x16xbf16>, vector<16x16xf32> -> vector<16x16xf32>
    %cst_16 = arith.constant 1.000000e+00 : f32
    %12 = vector.broadcast %cst_16 : f32 to vector<16x16xf32>
    %13 = arith.mulf %12, %3 : vector<16x16xf32>
    %14 = arith.addf %13, %11 : vector<16x16xf32>
    %15 = arith.truncf %14 : vector<16x16xf32> to vector<16x16xbf16>
    %cst_17 = arith.constant dense<0.000000e+00> : vector<16x48xf32>
    %16 = tpu.matmul %15, %6, %cst_17 {dimension_numbers = #tpu.dot_dimension_numbers<[1], [0], [0], [1], [0, 0, 1, 1], [], []>} : vector<16x16xbf16>, vector<16x48xbf16>, vector<16x48xf32> -> vector<16x48xf32>
    %17 = vector.broadcast %7 : vector<1x48xf32> to vector<16x48xf32>
    %18 = arith.addf %16, %17 : vector<16x48xf32>
    %cst_18 = arith.constant 0.000000e+00 : f32
    %19 = vector.broadcast %cst_18 : f32 to vector<16x48xf32>
    %20 = arith.maximumf %18, %19 : vector<16x48xf32>
    %21 = arith.truncf %20 : vector<16x48xf32> to vector<16x48xbf16>
    %cst_19 = arith.constant dense<0.000000e+00> : vector<16x32xf32>
    %22 = tpu.matmul %21, %8, %cst_19 {dimension_numbers = #tpu.dot_dimension_numbers<[1], [0], [0], [1], [0, 0, 1, 1], [], []>} : vector<16x48xbf16>, vector<48x32xbf16>, vector<16x32xf32> -> vector<16x32xf32>
    %23 = vector.broadcast %9 : vector<1x32xf32> to vector<16x32xf32>
    %24 = arith.addf %22, %23 : vector<16x32xf32>
    %cst_20 = arith.constant 0.000000e+00 : f32
    %25 = vector.broadcast %cst_20 : f32 to vector<16x32xf32>
    %26 = arith.maximumf %24, %25 : vector<16x32xf32>
    %27 = math.tanh %26 : vector<16x32xf32>
    %c0_21 = arith.constant 0 : index
    %c0_22 = arith.constant 0 : index
    %28 = vector.load %arg8[%c0_21, %c0_22] : memref<32x96xbf16, #tpu.memory_space<vmem>>, vector<32x96xbf16>
    %c0_23 = arith.constant 0 : index
    %c0_24 = arith.constant 0 : index
    %29 = vector.load %arg9[%c0_23, %c0_24] : memref<1x96xf32, #tpu.memory_space<vmem>>, vector<1x96xf32>
    %c0_25 = arith.constant 0 : index
    %c0_26 = arith.constant 0 : index
    %30 = vector.load %arg10[%c0_25, %c0_26] : memref<96x32xbf16, #tpu.memory_space<vmem>>, vector<96x32xbf16>
    %c0_27 = arith.constant 0 : index
    %c0_28 = arith.constant 0 : index
    %31 = vector.load %arg11[%c0_27, %c0_28] : memref<1x32xf32, #tpu.memory_space<vmem>>, vector<1x32xf32>
    %32 = arith.truncf %27 : vector<16x32xf32> to vector<16x32xbf16>
    %cst_29 = arith.constant dense<0.000000e+00> : vector<16x32xf32>
    %33 = tpu.matmul %1, %32, %cst_29 {dimension_numbers = #tpu.dot_dimension_numbers<[1], [0], [0], [1], [0, 0, 1, 1], [], []>} : vector<16x16xbf16>, vector<16x32xbf16>, vector<16x32xf32> -> vector<16x32xf32>
    %cst_30 = arith.constant 1.000000e+00 : f32
    %34 = vector.broadcast %cst_30 : f32 to vector<16x32xf32>
    %35 = arith.mulf %34, %27 : vector<16x32xf32>
    %36 = arith.addf %35, %33 : vector<16x32xf32>
    %37 = arith.truncf %36 : vector<16x32xf32> to vector<16x32xbf16>
    %cst_31 = arith.constant dense<0.000000e+00> : vector<16x96xf32>
    %38 = tpu.matmul %37, %28, %cst_31 {dimension_numbers = #tpu.dot_dimension_numbers<[1], [0], [0], [1], [0, 0, 1, 1], [], []>} : vector<16x32xbf16>, vector<32x96xbf16>, vector<16x96xf32> -> vector<16x96xf32>
    %39 = vector.broadcast %29 : vector<1x96xf32> to vector<16x96xf32>
    %40 = arith.addf %38, %39 : vector<16x96xf32>
    %cst_32 = arith.constant 0.000000e+00 : f32
    %41 = vector.broadcast %cst_32 : f32 to vector<16x96xf32>
    %42 = arith.maximumf %40, %41 : vector<16x96xf32>
    %43 = arith.truncf %42 : vector<16x96xf32> to vector<16x96xbf16>
    %cst_33 = arith.constant dense<0.000000e+00> : vector<16x32xf32>
    %44 = tpu.matmul %43, %30, %cst_33 {dimension_numbers = #tpu.dot_dimension_numbers<[1], [0], [0], [1], [0, 0, 1, 1], [], []>} : vector<16x96xbf16>, vector<96x32xbf16>, vector<16x32xf32> -> vector<16x32xf32>
    %45 = vector.broadcast %31 : vector<1x32xf32> to vector<16x32xf32>
    %46 = arith.addf %44, %45 : vector<16x32xf32>
    %cst_34 = arith.constant 0.000000e+00 : f32
    %47 = vector.broadcast %cst_34 : f32 to vector<16x32xf32>
    %48 = arith.maximumf %46, %47 : vector<16x32xf32>
    %49 = math.tanh %48 : vector<16x32xf32>
    %c0_35 = arith.constant 0 : index
    %c0_36 = arith.constant 0 : index
    %50 = vector.load %arg12[%c0_35, %c0_36] : memref<32x96xbf16, #tpu.memory_space<vmem>>, vector<32x96xbf16>
    %c0_37 = arith.constant 0 : index
    %c0_38 = arith.constant 0 : index
    %51 = vector.load %arg13[%c0_37, %c0_38] : memref<1x96xf32, #tpu.memory_space<vmem>>, vector<1x96xf32>
    %c0_39 = arith.constant 0 : index
    %c0_40 = arith.constant 0 : index
    %52 = vector.load %arg14[%c0_39, %c0_40] : memref<96x32xbf16, #tpu.memory_space<vmem>>, vector<96x32xbf16>
    %c0_41 = arith.constant 0 : index
    %c0_42 = arith.constant 0 : index
    %53 = vector.load %arg15[%c0_41, %c0_42] : memref<1x32xf32, #tpu.memory_space<vmem>>, vector<1x32xf32>
    %54 = arith.truncf %49 : vector<16x32xf32> to vector<16x32xbf16>
    %cst_43 = arith.constant dense<0.000000e+00> : vector<16x32xf32>
    %55 = tpu.matmul %1, %54, %cst_43 {dimension_numbers = #tpu.dot_dimension_numbers<[1], [0], [0], [1], [0, 0, 1, 1], [], []>} : vector<16x16xbf16>, vector<16x32xbf16>, vector<16x32xf32> -> vector<16x32xf32>
    %cst_44 = arith.constant 1.000000e+00 : f32
    %56 = vector.broadcast %cst_44 : f32 to vector<16x32xf32>
    %57 = arith.mulf %56, %49 : vector<16x32xf32>
    %58 = arith.addf %57, %55 : vector<16x32xf32>
    %59 = arith.truncf %58 : vector<16x32xf32> to vector<16x32xbf16>
    %cst_45 = arith.constant dense<0.000000e+00> : vector<16x96xf32>
    %60 = tpu.matmul %59, %50, %cst_45 {dimension_numbers = #tpu.dot_dimension_numbers<[1], [0], [0], [1], [0, 0, 1, 1], [], []>} : vector<16x32xbf16>, vector<32x96xbf16>, vector<16x96xf32> -> vector<16x96xf32>
    %61 = vector.broadcast %51 : vector<1x96xf32> to vector<16x96xf32>
    %62 = arith.addf %60, %61 : vector<16x96xf32>
    %cst_46 = arith.constant 0.000000e+00 : f32
    %63 = vector.broadcast %cst_46 : f32 to vector<16x96xf32>
    %64 = arith.maximumf %62, %63 : vector<16x96xf32>
    %65 = arith.truncf %64 : vector<16x96xf32> to vector<16x96xbf16>
    %cst_47 = arith.constant dense<0.000000e+00> : vector<16x32xf32>
    %66 = tpu.matmul %65, %52, %cst_47 {dimension_numbers = #tpu.dot_dimension_numbers<[1], [0], [0], [1], [0, 0, 1, 1], [], []>} : vector<16x96xbf16>, vector<96x32xbf16>, vector<16x32xf32> -> vector<16x32xf32>
    %67 = vector.broadcast %53 : vector<1x32xf32> to vector<16x32xf32>
    %68 = arith.addf %66, %67 : vector<16x32xf32>
    %cst_48 = arith.constant 0.000000e+00 : f32
    %69 = vector.broadcast %cst_48 : f32 to vector<16x32xf32>
    %70 = arith.maximumf %68, %69 : vector<16x32xf32>
    %71 = math.tanh %70 : vector<16x32xf32>
    %c0_49 = arith.constant 0 : index
    %c0_50 = arith.constant 0 : index
    %72 = vector.load %arg16[%c0_49, %c0_50] : memref<32x96xbf16, #tpu.memory_space<vmem>>, vector<32x96xbf16>
    %c0_51 = arith.constant 0 : index
    %c0_52 = arith.constant 0 : index
    %73 = vector.load %arg17[%c0_51, %c0_52] : memref<1x96xf32, #tpu.memory_space<vmem>>, vector<1x96xf32>
    %c0_53 = arith.constant 0 : index
    %c0_54 = arith.constant 0 : index
    %74 = vector.load %arg18[%c0_53, %c0_54] : memref<96x32xbf16, #tpu.memory_space<vmem>>, vector<96x32xbf16>
    %c0_55 = arith.constant 0 : index
    %c0_56 = arith.constant 0 : index
    %75 = vector.load %arg19[%c0_55, %c0_56] : memref<1x32xf32, #tpu.memory_space<vmem>>, vector<1x32xf32>
    %76 = arith.truncf %71 : vector<16x32xf32> to vector<16x32xbf16>
    %cst_57 = arith.constant dense<0.000000e+00> : vector<16x32xf32>
    %77 = tpu.matmul %1, %76, %cst_57 {dimension_numbers = #tpu.dot_dimension_numbers<[1], [0], [0], [1], [0, 0, 1, 1], [], []>} : vector<16x16xbf16>, vector<16x32xbf16>, vector<16x32xf32> -> vector<16x32xf32>
    %cst_58 = arith.constant 1.000000e+00 : f32
    %78 = vector.broadcast %cst_58 : f32 to vector<16x32xf32>
    %79 = arith.mulf %78, %71 : vector<16x32xf32>
    %80 = arith.addf %79, %77 : vector<16x32xf32>
    %81 = arith.truncf %80 : vector<16x32xf32> to vector<16x32xbf16>
    %cst_59 = arith.constant dense<0.000000e+00> : vector<16x96xf32>
    %82 = tpu.matmul %81, %72, %cst_59 {dimension_numbers = #tpu.dot_dimension_numbers<[1], [0], [0], [1], [0, 0, 1, 1], [], []>} : vector<16x32xbf16>, vector<32x96xbf16>, vector<16x96xf32> -> vector<16x96xf32>
    %83 = vector.broadcast %73 : vector<1x96xf32> to vector<16x96xf32>
    %84 = arith.addf %82, %83 : vector<16x96xf32>
    %cst_60 = arith.constant 0.000000e+00 : f32
    %85 = vector.broadcast %cst_60 : f32 to vector<16x96xf32>
    %86 = arith.maximumf %84, %85 : vector<16x96xf32>
    %87 = arith.truncf %86 : vector<16x96xf32> to vector<16x96xbf16>
    %cst_61 = arith.constant dense<0.000000e+00> : vector<16x32xf32>
    %88 = tpu.matmul %87, %74, %cst_61 {dimension_numbers = #tpu.dot_dimension_numbers<[1], [0], [0], [1], [0, 0, 1, 1], [], []>} : vector<16x96xbf16>, vector<96x32xbf16>, vector<16x32xf32> -> vector<16x32xf32>
    %89 = vector.broadcast %75 : vector<1x32xf32> to vector<16x32xf32>
    %90 = arith.addf %88, %89 : vector<16x32xf32>
    %cst_62 = arith.constant 0.000000e+00 : f32
    %91 = vector.broadcast %cst_62 : f32 to vector<16x32xf32>
    %92 = arith.maximumf %90, %91 : vector<16x32xf32>
    %93 = math.tanh %92 : vector<16x32xf32>
    %cst_63 = arith.constant 5.000000e-01 : f32
    %94 = vector.broadcast %cst_63 : f32 to vector<16x1xf32>
    %95 = arith.cmpf ogt, %5, %94 : vector<16x1xf32>
    %cst_64 = arith.constant -1.000000e+30 : f32
    %96 = vector.shape_cast %95 : vector<16x1xi1> to vector<16x1xi1>
    %97 = vector.broadcast %96 : vector<16x1xi1> to vector<16x32xi1>
    %98 = vector.broadcast %cst_64 : f32 to vector<16x32xf32>
    %99 = arith.select %97, %93, %98 : vector<16x32xi1>, vector<16x32xf32>
    %cst_65 = arith.constant dense<0xFF800000> : vector<32xf32>
    %100 = vector.multi_reduction <maximumf>, %99, %cst_65 [0] : vector<16x32xf32> to vector<32xf32>
    %101 = vector.shape_cast %100 : vector<32xf32> to vector<1x32xf32>
    %cst_66 = arith.constant dense<0.000000e+00> : vector<1xf32>
    %102 = vector.multi_reduction <add>, %5, %cst_66 [0] : vector<16x1xf32> to vector<1xf32>
    %103 = vector.shape_cast %102 : vector<1xf32> to vector<1x1xf32>
    %cst_67 = arith.constant 5.000000e-01 : f32
    %104 = vector.broadcast %cst_67 : f32 to vector<1x1xf32>
    %105 = arith.cmpf ogt, %103, %104 : vector<1x1xf32>
    %cst_68 = arith.constant 0.000000e+00 : f32
    %106 = vector.shape_cast %105 : vector<1x1xi1> to vector<1x1xi1>
    %107 = vector.broadcast %106 : vector<1x1xi1> to vector<1x32xi1>
    %108 = vector.broadcast %cst_68 : f32 to vector<1x32xf32>
    %109 = arith.select %107, %101, %108 : vector<1x32xi1>, vector<1x32xf32>
    %c0_69 = arith.constant 0 : index
    %c0_70 = arith.constant 0 : index
    %110 = vector.load %arg20[%c0_69, %c0_70] : memref<32x32xbf16, #tpu.memory_space<vmem>>, vector<32x32xbf16>
    %c0_71 = arith.constant 0 : index
    %c0_72 = arith.constant 0 : index
    %111 = vector.load %arg21[%c0_71, %c0_72] : memref<1x32xf32, #tpu.memory_space<vmem>>, vector<1x32xf32>
    %c0_73 = arith.constant 0 : index
    %c0_74 = arith.constant 0 : index
    %112 = vector.load %arg22[%c0_73, %c0_74] : memref<32x32xbf16, #tpu.memory_space<vmem>>, vector<32x32xbf16>
    %c0_75 = arith.constant 0 : index
    %c0_76 = arith.constant 0 : index
    %113 = vector.load %arg23[%c0_75, %c0_76] : memref<1x32xf32, #tpu.memory_space<vmem>>, vector<1x32xf32>
    %c0_77 = arith.constant 0 : index
    %c0_78 = arith.constant 0 : index
    %114 = vector.load %arg24[%c0_77, %c0_78] : memref<32x2xbf16, #tpu.memory_space<vmem>>, vector<32x2xbf16>
    %c0_79 = arith.constant 0 : index
    %c0_80 = arith.constant 0 : index
    %115 = vector.load %arg25[%c0_79, %c0_80] : memref<1x2xf32, #tpu.memory_space<vmem>>, vector<1x2xf32>
    %116 = arith.truncf %109 : vector<1x32xf32> to vector<1x32xbf16>
    %cst_81 = arith.constant dense<0.000000e+00> : vector<1x32xf32>
    %117 = tpu.matmul %116, %110, %cst_81 {dimension_numbers = #tpu.dot_dimension_numbers<[1], [0], [0], [1], [0, 0, 1, 1], [], []>} : vector<1x32xbf16>, vector<32x32xbf16>, vector<1x32xf32> -> vector<1x32xf32>
    %118 = arith.addf %117, %111 : vector<1x32xf32>
    %cst_82 = arith.constant 0.000000e+00 : f32
    %119 = vector.broadcast %cst_82 : f32 to vector<1x32xf32>
    %120 = arith.cmpf ogt, %118, %119 : vector<1x32xf32>
    %121 = math.exp %118 : vector<1x32xf32>
    %cst_83 = arith.constant 1.000000e+00 : f32
    %122 = vector.broadcast %cst_83 : f32 to vector<1x32xf32>
    %123 = arith.subf %121, %122 : vector<1x32xf32>
    %124 = arith.select %120, %118, %123 : vector<1x32xi1>, vector<1x32xf32>
    %125 = arith.truncf %124 : vector<1x32xf32> to vector<1x32xbf16>
    %cst_84 = arith.constant dense<0.000000e+00> : vector<1x32xf32>
    %126 = tpu.matmul %125, %112, %cst_84 {dimension_numbers = #tpu.dot_dimension_numbers<[1], [0], [0], [1], [0, 0, 1, 1], [], []>} : vector<1x32xbf16>, vector<32x32xbf16>, vector<1x32xf32> -> vector<1x32xf32>
    %127 = arith.addf %126, %113 : vector<1x32xf32>
    %cst_85 = arith.constant 0.000000e+00 : f32
    %128 = vector.broadcast %cst_85 : f32 to vector<1x32xf32>
    %129 = arith.cmpf ogt, %127, %128 : vector<1x32xf32>
    %130 = math.exp %127 : vector<1x32xf32>
    %cst_86 = arith.constant 1.000000e+00 : f32
    %131 = vector.broadcast %cst_86 : f32 to vector<1x32xf32>
    %132 = arith.subf %130, %131 : vector<1x32xf32>
    %133 = arith.select %129, %127, %132 : vector<1x32xi1>, vector<1x32xf32>
    %134 = arith.truncf %133 : vector<1x32xf32> to vector<1x32xbf16>
    %cst_87 = arith.constant dense<0.000000e+00> : vector<1x2xf32>
    %135 = tpu.matmul %134, %114, %cst_87 {dimension_numbers = #tpu.dot_dimension_numbers<[1], [0], [0], [1], [0, 0, 1, 1], [], []>} : vector<1x32xbf16>, vector<32x2xbf16>, vector<1x2xf32> -> vector<1x2xf32>
    %136 = arith.addf %135, %115 : vector<1x2xf32>
    %cst_88 = arith.constant dense<0xFF800000> : vector<1xf32>
    %137 = vector.multi_reduction <maximumf>, %136, %cst_88 [1] : vector<1x2xf32> to vector<1xf32>
    %138 = vector.shape_cast %137 : vector<1xf32> to vector<1x1xf32>
    %139 = vector.broadcast %138 : vector<1x1xf32> to vector<1x2xf32>
    %140 = arith.subf %136, %139 : vector<1x2xf32>
    %141 = math.exp %140 : vector<1x2xf32>
    %cst_89 = arith.constant dense<0.000000e+00> : vector<1xf32>
    %142 = vector.multi_reduction <add>, %141, %cst_89 [1] : vector<1x2xf32> to vector<1xf32>
    %143 = vector.shape_cast %142 : vector<1xf32> to vector<1x1xf32>
    %144 = math.log %143 : vector<1x1xf32>
    %145 = arith.addf %138, %144 : vector<1x1xf32>
    %146 = vector.broadcast %145 : vector<1x1xf32> to vector<1x2xf32>
    %147 = arith.subf %136, %146 : vector<1x2xf32>
    %c0_90 = arith.constant 0 : index
    %c0_91 = arith.constant 0 : index
    %c0_92 = arith.constant 0 : index
    %148 = vector.load %arg26[%c0_90, %c0_91, %c0_92] : memref<1x1x2xf32, #tpu.memory_space<vmem>>, vector<1x1x2xf32>
    %149 = vector.shape_cast %148 : vector<1x1x2xf32> to vector<1x2xf32>
    %150 = vector.shape_cast %147 : vector<1x2xf32> to vector<1x1x2xf32>
    tpu.vector_store %arg26[%c0_90, %c0_91, %c0_92], %150 {strides = array<i32>} : memref<1x1x2xf32, #tpu.memory_space<vmem>>, vector<1x1x2xf32>,
    return
  }
  func.func @transform_0(%arg0: i32) -> (i32, i32, i32) {
    %c0_i32 = arith.constant 0 : i32
    %c0_i32_0 = arith.constant 0 : i32
    %c0_i32_1 = arith.constant 0 : i32
    return %arg0, %c0_i32, %c0_i32_0 : i32, i32, i32
  }
  func.func @transform_1(%arg0: i32) -> (i32, i32, i32) {
    %c0_i32 = arith.constant 0 : i32
    %c0_i32_0 = arith.constant 0 : i32
    %c0_i32_1 = arith.constant 0 : i32
    return %arg0, %c0_i32, %c0_i32_0 : i32, i32, i32
  }
  func.func @transform_2(%arg0: i32) -> (i32, i32, i32) {
    %c0_i32 = arith.constant 0 : i32
    %c0_i32_0 = arith.constant 0 : i32
    %c0_i32_1 = arith.constant 0 : i32
    return %arg0, %c0_i32, %c0_i32_0 : i32, i32, i32
  }
  func.func @transform_3(%arg0: i32) -> (i32, i32) {
    %c0_i32 = arith.constant 0 : i32
    %c0_i32_0 = arith.constant 0 : i32
    %c0_i32_1 = arith.constant 0 : i32
    return %c0_i32, %c0_i32_0 : i32, i32
  }
  func.func @transform_4(%arg0: i32) -> (i32, i32) {
    %c0_i32 = arith.constant 0 : i32
    %c0_i32_0 = arith.constant 0 : i32
    %c0_i32_1 = arith.constant 0 : i32
    return %c0_i32, %c0_i32_0 : i32, i32
  }
  func.func @transform_5(%arg0: i32) -> (i32, i32) {
    %c0_i32 = arith.constant 0 : i32
    %c0_i32_0 = arith.constant 0 : i32
    %c0_i32_1 = arith.constant 0 : i32
    return %c0_i32, %c0_i32_0 : i32, i32
  }
  func.func @transform_6(%arg0: i32) -> (i32, i32) {
    %c0_i32 = arith.constant 0 : i32
    %c0_i32_0 = arith.constant 0 : i32
    %c0_i32_1 = arith.constant 0 : i32
    return %c0_i32, %c0_i32_0 : i32, i32
  }
  func.func @transform_7(%arg0: i32) -> (i32, i32) {
    %c0_i32 = arith.constant 0 : i32
    %c0_i32_0 = arith.constant 0 : i32
    %c0_i32_1 = arith.constant 0 : i32
    return %c0_i32, %c0_i32_0 : i32, i32
  }
  func.func @transform_8(%arg0: i32) -> (i32, i32) {
    %c0_i32 = arith.constant 0 : i32
    %c0_i32_0 = arith.constant 0 : i32
    %c0_i32_1 = arith.constant 0 : i32
    return %c0_i32, %c0_i32_0 : i32, i32
  }
  func.func @transform_9(%arg0: i32) -> (i32, i32) {
    %c0_i32 = arith.constant 0 : i32
    %c0_i32_0 = arith.constant 0 : i32
    %c0_i32_1 = arith.constant 0 : i32
    return %c0_i32, %c0_i32_0 : i32, i32
  }
  func.func @transform_10(%arg0: i32) -> (i32, i32) {
    %c0_i32 = arith.constant 0 : i32
    %c0_i32_0 = arith.constant 0 : i32
    %c0_i32_1 = arith.constant 0 : i32
    return %c0_i32, %c0_i32_0 : i32, i32
  }
  func.func @transform_11(%arg0: i32) -> (i32, i32) {
    %c0_i32 = arith.constant 0 : i32
    %c0_i32_0 = arith.constant 0 : i32
    %c0_i32_1 = arith.constant 0 : i32
    return %c0_i32, %c0_i32_0 : i32, i32
  }
  func.func @transform_12(%arg0: i32) -> (i32, i32) {
    %c0_i32 = arith.constant 0 : i32
    %c0_i32_0 = arith.constant 0 : i32
    %c0_i32_1 = arith.constant 0 : i32
    return %c0_i32, %c0_i32_0 : i32, i32
  }
  func.func @transform_13(%arg0: i32) -> (i32, i32) {
    %c0_i32 = arith.constant 0 : i32
    %c0_i32_0 = arith.constant 0 : i32
    %c0_i32_1 = arith.constant 0 : i32
    return %c0_i32, %c0_i32_0 : i32, i32
  }
  func.func @transform_14(%arg0: i32) -> (i32, i32) {
    %c0_i32 = arith.constant 0 : i32
    %c0_i32_0 = arith.constant 0 : i32
    %c0_i32_1 = arith.constant 0 : i32
    return %c0_i32, %c0_i32_0 : i32, i32
  }
  func.func @transform_15(%arg0: i32) -> (i32, i32) {
    %c0_i32 = arith.constant 0 : i32
    %c0_i32_0 = arith.constant 0 : i32
    %c0_i32_1 = arith.constant 0 : i32
    return %c0_i32, %c0_i32_0 : i32, i32
  }
  func.func @transform_16(%arg0: i32) -> (i32, i32) {
    %c0_i32 = arith.constant 0 : i32
    %c0_i32_0 = arith.constant 0 : i32
    %c0_i32_1 = arith.constant 0 : i32
    return %c0_i32, %c0_i32_0 : i32, i32
  }
  func.func @transform_17(%arg0: i32) -> (i32, i32) {
    %c0_i32 = arith.constant 0 : i32
    %c0_i32_0 = arith.constant 0 : i32
    %c0_i32_1 = arith.constant 0 : i32
    return %c0_i32, %c0_i32_0 : i32, i32
  }
  func.func @transform_18(%arg0: i32) -> (i32, i32) {
    %c0_i32 = arith.constant 0 : i32
    %c0_i32_0 = arith.constant 0 : i32
    %c0_i32_1 = arith.constant 0 : i32
    return %c0_i32, %c0_i32_0 : i32, i32
  }
  func.func @transform_19(%arg0: i32) -> (i32, i32) {
    %c0_i32 = arith.constant 0 : i32
    %c0_i32_0 = arith.constant 0 : i32
    %c0_i32_1 = arith.constant 0 : i32
    return %c0_i32, %c0_i32_0 : i32, i32
  }
  func.func @transform_20(%arg0: i32) -> (i32, i32) {
    %c0_i32 = arith.constant 0 : i32
    %c0_i32_0 = arith.constant 0 : i32
    %c0_i32_1 = arith.constant 0 : i32
    return %c0_i32, %c0_i32_0 : i32, i32
  }
  func.func @transform_21(%arg0: i32) -> (i32, i32) {
    %c0_i32 = arith.constant 0 : i32
    %c0_i32_0 = arith.constant 0 : i32
    %c0_i32_1 = arith.constant 0 : i32
    return %c0_i32, %c0_i32_0 : i32, i32
  }
  func.func @transform_22(%arg0: i32) -> (i32, i32) {
    %c0_i32 = arith.constant 0 : i32
    %c0_i32_0 = arith.constant 0 : i32
    %c0_i32_1 = arith.constant 0 : i32
    return %c0_i32, %c0_i32_0 : i32, i32
  }
  func.func @transform_23(%arg0: i32) -> (i32, i32) {
    %c0_i32 = arith.constant 0 : i32
    %c0_i32_0 = arith.constant 0 : i32
    %c0_i32_1 = arith.constant 0 : i32
    return %c0_i32, %c0_i32_0 : i32, i32
  }
  func.func @transform_24(%arg0: i32) -> (i32, i32) {
    %c0_i32 = arith.constant 0 : i32
    %c0_i32_0 = arith.constant 0 : i32
    %c0_i32_1 = arith.constant 0 : i32
    return %c0_i32, %c0_i32_0 : i32, i32
  }
  func.func @transform_25(%arg0: i32) -> (i32, i32, i32) {
    %c0_i32 = arith.constant 0 : i32
    %c0_i32_0 = arith.constant 0 : i32
    %c0_i32_1 = arith.constant 0 : i32
    return %arg0, %c0_i32, %c0_i32_0 : i32, i32, i32
  }
}

</mosaic_0001>

<llo_original>
// kernel: tpu_custom_call.1
$region0: #{tpu_custom_call.1}
  #allocation0 [shape = 'u32[]', space=smem, size = 0x4, offset = 0x4, fixed_abs, tag = 'smem constant byte address 0x4 - core index']
  #allocation1 [shape = 'u32[144,128]{1,0:T(1,128)}', space=vmem, size = 0x12000, scoped, tag = 'internal scratch']
  %s0 = inlined_call_operand.vmem [shape: bf16[2,16,16], index: 0, kind: input, shape index: {}]
  %s1 = inlined_call_operand.vmem [shape: f32[2,16,16], index: 1, kind: input, shape index: {}]
  %s2 = inlined_call_operand.vmem [shape: f32[2,16,1], index: 2, kind: input, shape index: {}]
  %s3 = inlined_call_operand.vmem [shape: bf16[16,48], index: 3, kind: input, shape index: {}]
  %s4 = inlined_call_operand.vmem [shape: f32[1,48], index: 4, kind: input, shape index: {}]
  %s5 = inlined_call_operand.vmem [shape: bf16[48,32], index: 5, kind: input, shape index: {}]
  %s6 = inlined_call_operand.vmem [shape: f32[1,32], index: 6, kind: input, shape index: {}]
  %s7 = inlined_call_operand.vmem [shape: bf16[32,96], index: 7, kind: input, shape index: {}]
  %s8 = inlined_call_operand.vmem [shape: f32[1,96], index: 8, kind: input, shape index: {}]
  %s9 = inlined_call_operand.vmem [shape: bf16[96,32], index: 9, kind: input, shape index: {}]
  %s10 = inlined_call_operand.vmem [shape: f32[1,32], index: 10, kind: input, shape index: {}]
  %s11 = inlined_call_operand.vmem [shape: bf16[32,96], index: 11, kind: input, shape index: {}]
  %s12 = inlined_call_operand.vmem [shape: f32[1,96], index: 12, kind: input, shape index: {}]
  %s13 = inlined_call_operand.vmem [shape: bf16[96,32], index: 13, kind: input, shape index: {}]
  %s14 = inlined_call_operand.vmem [shape: f32[1,32], index: 14, kind: input, shape index: {}]
  %s15 = inlined_call_operand.vmem [shape: bf16[32,96], index: 15, kind: input, shape index: {}]
  %s16 = inlined_call_operand.vmem [shape: f32[1,96], index: 16, kind: input, shape index: {}]
  %s17 = inlined_call_operand.vmem [shape: bf16[96,32], index: 17, kind: input, shape index: {}]
  %s18 = inlined_call_operand.vmem [shape: f32[1,32], index: 18, kind: input, shape index: {}]
  %s19 = inlined_call_operand.vmem [shape: bf16[32,32], index: 19, kind: input, shape index: {}]
  %s20 = inlined_call_operand.vmem [shape: f32[1,32], index: 20, kind: input, shape index: {}]
  %s21 = inlined_call_operand.vmem [shape: bf16[32,32], index: 21, kind: input, shape index: {}]
  %s22 = inlined_call_operand.vmem [shape: f32[1,32], index: 22, kind: input, shape index: {}]
  %s23 = inlined_call_operand.vmem [shape: bf16[32,2], index: 23, kind: input, shape index: {}]
  %s24 = inlined_call_operand.vmem [shape: f32[1,2], index: 24, kind: input, shape index: {}]
  %s25 = inlined_call_operand.hbm [shape: f32[2,1,2], index: 25, kind: output, shape index: {}]
  %s26 = sld [smem:[#allocation0]]
  $region133: #{tpu_custom_call.1} parent=0
    _
  %s28 = ssub.s32 1, %s26
  %s29 = scalar_select 0, %s28, %s26
  $region1: #{tpu_custom_call.1} parent=0
    #allocation2 [shape = 'u8[1024]{0}', space=vmem, size = 0x400, scoped, tag = 'output window, operand 0']
    #allocation3 [shape = 's32[2]{0}', space=sflag, size = 0x8, scoped, tag = 'scoped memory for tpu_custom_call.1']
    %30 = vsyncpa [#allocation3], 0
    %s31 = scalar_lea.sflag [#allocation3], 1
    %32 = vsyncpa %s31, 0
    loop: start=0, step=1, limit=4
    $region2: #{tpu_custom_call.1} parent=1 // loop_pre_header
      _
    $region3: #{tpu_custom_call.1} parent=1 // loop_header
      %s34 = sphi 0, %s38
      %p35 = scmp.ge.s32.totalorder %s34, 4
      %s44 = sphi 0, %s46
      %s47 = sphi 0, %s44
      %s48 = sphi 0, %s47
      %s64 = sphi 0, %s48
      %s70 = sphi 0, %s72
      %s73 = sphi 0, %s70
      %s74 = sphi 0, %s73
      %s90 = sphi 0, %s74
      %s96 = sphi 0, %s98
      %s99 = sphi 0, %s96
      %s100 = sphi 0, %s99
      %s116 = sphi 0, %s100
      %s120 = sphi 0, %s120
      %s122 = sphi 0, %s120
      %s123 = sphi 0, %s122
      %s137 = sphi 0, %s123
      %s141 = sphi 0, %s141
      %s143 = sphi 0, %s141
      %s144 = sphi 0, %s143
      %s158 = sphi 0, %s144
      %s162 = sphi 0, %s162
      %s164 = sphi 0, %s162
      %s165 = sphi 0, %s164
      %s179 = sphi 0, %s165
      %s183 = sphi 0, %s183
      %s185 = sphi 0, %s183
      %s186 = sphi 0, %s185
      %s200 = sphi 0, %s186
      %s204 = sphi 0, %s204
      %s206 = sphi 0, %s204
      %s207 = sphi 0, %s206
      %s221 = sphi 0, %s207
      %s225 = sphi 0, %s225
      %s227 = sphi 0, %s225
      %s228 = sphi 0, %s227
      %s242 = sphi 0, %s228
      %s246 = sphi 0, %s246
      %s248 = sphi 0, %s246
      %s249 = sphi 0, %s248
      %s263 = sphi 0, %s249
      %s267 = sphi 0, %s267
      %s269 = sphi 0, %s267
      %s270 = sphi 0, %s269
      %s284 = sphi 0, %s270
      %s288 = sphi 0, %s288
      %s290 = sphi 0, %s288
      %s291 = sphi 0, %s290
      %s305 = sphi 0, %s291
      %s309 = sphi 0, %s309
      %s311 = sphi 0, %s309
      %s312 = sphi 0, %s311
      %s326 = sphi 0, %s312
      %s330 = sphi 0, %s330
      %s332 = sphi 0, %s330
      %s333 = sphi 0, %s332
      %s347 = sphi 0, %s333
      %s351 = sphi 0, %s351
      %s353 = sphi 0, %s351
      %s354 = sphi 0, %s353
      %s368 = sphi 0, %s354
      %s372 = sphi 0, %s372
      %s374 = sphi 0, %s372
      %s375 = sphi 0, %s374
      %s389 = sphi 0, %s375
      %s393 = sphi 0, %s393
      %s395 = sphi 0, %s393
      %s396 = sphi 0, %s395
      %s410 = sphi 0, %s396
      %s414 = sphi 0, %s414
      %s416 = sphi 0, %s414
      %s417 = sphi 0, %s416
      %s431 = sphi 0, %s417
      %s435 = sphi 0, %s435
      %s437 = sphi 0, %s435
      %s438 = sphi 0, %s437
      %s452 = sphi 0, %s438
      %s456 = sphi 0, %s456
      %s458 = sphi 0, %s456
      %s459 = sphi 0, %s458
      %s473 = sphi 0, %s459
      %s477 = sphi 0, %s477
      %s479 = sphi 0, %s477
      %s480 = sphi 0, %s479
      %s494 = sphi 0, %s480
      %s498 = sphi 0, %s498
      %s500 = sphi 0, %s498
      %s501 = sphi 0, %s500
      %s515 = sphi 0, %s501
      %s519 = sphi 0, %s519
      %s521 = sphi 0, %s519
      %s522 = sphi 0, %s521
      %s536 = sphi 0, %s522
      %s540 = sphi 0, %s540
      %s542 = sphi 0, %s540
      %s543 = sphi 0, %s542
      %s557 = sphi 0, %s543
      %s561 = sphi 0, %s561
      %s563 = sphi 0, %s561
      %s564 = sphi 0, %s563
      %s578 = sphi 0, %s564
      %s584 = sphi 0, %s586
      %s587 = sphi 0, %s584
      %s588 = sphi 0, %s587
      %s604 = sphi 0, %s588
    $region4: #{tpu_custom_call.1} parent=1 // loop_header_branch
      %37 = sbr.rel (%p35) target = $region8
    $region5: #{tpu_custom_call.1} parent=1 // loop_body
      %s39 = ssub.s32 %s34, 1
      %s40 = ssub.s32 %s34, 2
      %s41 = sadd.s32 %s34, 1
      %s42 = ssub.s32 %s34, %s41
      %p43 = scmp.eq.s32.totalorder %s42, 0
      %s45 = sadd.s32 %s44, 1
      %s46 = scalar_select %p43, %s44, %s45
      %p49 = pneg %p43
      %p50 = scmp.eq.s32.totalorder %s34, 1
      %p51 = por %p49, %p50
      %p52 = scmp.ne.s32.totalorder %s44, %s47
      %p53 = scmp.eq.s32.totalorder %s34, 0
      %p54 = por %p52, %p53
      %p55 = scmp.ne.s32.totalorder %s44, %s47
      %p56 = scmp.eq.s32.totalorder %s39, 1
      %p57 = por %p55, %p56
      %p58 = scmp.ne.s32.totalorder %s47, %s48
      %p59 = scmp.eq.s32.totalorder %s39, 0
      %p60 = por %p58, %p59
      %p61 = scmp.ne.s32.totalorder %s47, %s48
      %p62 = scmp.eq.s32.totalorder %s40, 1
      %p63 = por %p61, %p62
      %p65 = scmp.ne.s32.totalorder %s48, %s64
      %p66 = scmp.eq.s32.totalorder %s40, 0
      %p67 = por %p65, %p66
      %s68 = ssub.s32 %s34, %s41
      %p69 = scmp.eq.s32.totalorder %s68, 0
      %s71 = sadd.s32 %s70, 1
      %s72 = scalar_select %p69, %s70, %s71
      %p75 = pneg %p69
      %p76 = scmp.eq.s32.totalorder %s34, 1
      %p77 = por %p75, %p76
      %p78 = scmp.ne.s32.totalorder %s70, %s73
      %p79 = scmp.eq.s32.totalorder %s34, 0
      %p80 = por %p78, %p79
      %p81 = scmp.ne.s32.totalorder %s70, %s73
      %p82 = scmp.eq.s32.totalorder %s39, 1
      %p83 = por %p81, %p82
      %p84 = scmp.ne.s32.totalorder %s73, %s74
      %p85 = scmp.eq.s32.totalorder %s39, 0
      %p86 = por %p84, %p85
      %p87 = scmp.ne.s32.totalorder %s73, %s74
      %p88 = scmp.eq.s32.totalorder %s40, 1
      %p89 = por %p87, %p88
      %p91 = scmp.ne.s32.totalorder %s74, %s90
      %p92 = scmp.eq.s32.totalorder %s40, 0
      %p93 = por %p91, %p92
      %s94 = ssub.s32 %s34, %s41
      %p95 = scmp.eq.s32.totalorder %s94, 0
      %s97 = sadd.s32 %s96, 1
      %s98 = scalar_select %p95, %s96, %s97
      %p101 = pneg %p95
      %p102 = scmp.eq.s32.totalorder %s34, 1
      %p103 = por %p101, %p102
      %p104 = scmp.ne.s32.totalorder %s96, %s99
      %p105 = scmp.eq.s32.totalorder %s34, 0
      %p106 = por %p104, %p105
      %p107 = scmp.ne.s32.totalorder %s96, %s99
      %p108 = scmp.eq.s32.totalorder %s39, 1
      %p109 = por %p107, %p108
      %p110 = scmp.ne.s32.totalorder %s99, %s100
      %p111 = scmp.eq.s32.totalorder %s39, 0
      %p112 = por %p110, %p111
      %p113 = scmp.ne.s32.totalorder %s99, %s100
      %p114 = scmp.eq.s32.totalorder %s40, 1
      %p115 = por %p113, %p114
      %p117 = scmp.ne.s32.totalorder %s100, %s116
      %p118 = scmp.eq.s32.totalorder %s40, 0
      %p119 = por %p117, %p118
      %s121 = sadd.s32 %s120, 1
      %p124 = scmp.eq.s32.totalorder %s34, 1
      %p125 = scmp.ne.s32.totalorder %s120, %s122
      %p126 = scmp.eq.s32.totalorder %s34, 0
      %p127 = por %p125, %p126
      %p128 = scmp.ne.s32.totalorder %s120, %s122
      %p129 = scmp.eq.s32.totalorder %s39, 1
      %p130 = por %p128, %p129
      %p131 = scmp.ne.s32.totalorder %s122, %s123
      %p132 = scmp.eq.s32.totalorder %s39, 0
      %p133 = por %p131, %p132
      %p134 = scmp.ne.s32.totalorder %s122, %s123
      %p135 = scmp.eq.s32.totalorder %s40, 1
      %p136 = por %p134, %p135
      %p138 = scmp.ne.s32.totalorder %s123, %s137
      %p139 = scmp.eq.s32.totalorder %s40, 0
      %p140 = por %p138, %p139
      %s142 = sadd.s32 %s141, 1
      %p145 = scmp.eq.s32.totalorder %s34, 1
      %p146 = scmp.ne.s32.totalorder %s141, %s143
      %p147 = scmp.eq.s32.totalorder %s34, 0
      %p148 = por %p146, %p147
      %p149 = scmp.ne.s32.totalorder %s141, %s143
      %p150 = scmp.eq.s32.totalorder %s39, 1
      %p151 = por %p149, %p150
      %p152 = scmp.ne.s32.totalorder %s143, %s144
      %p153 = scmp.eq.s32.totalorder %s39, 0
      %p154 = por %p152, %p153
      %p155 = scmp.ne.s32.totalorder %s143, %s144
      %p156 = scmp.eq.s32.totalorder %s40, 1
      %p157 = por %p155, %p156
      %p159 = scmp.ne.s32.totalorder %s144, %s158
      %p160 = scmp.eq.s32.totalorder %s40, 0
      %p161 = por %p159, %p160
      %s163 = sadd.s32 %s162, 1
      %p166 = scmp.eq.s32.totalorder %s34, 1
      %p167 = scmp.ne.s32.totalorder %s162, %s164
      %p168 = scmp.eq.s32.totalorder %s34, 0
      %p169 = por %p167, %p168
      %p170 = scmp.ne.s32.totalorder %s162, %s164
      %p171 = scmp.eq.s32.totalorder %s39, 1
      %p172 = por %p170, %p171
      %p173 = scmp.ne.s32.totalorder %s164, %s165
      %p174 = scmp.eq.s32.totalorder %s39, 0
      %p175 = por %p173, %p174
      %p176 = scmp.ne.s32.totalorder %s164, %s165
      %p177 = scmp.eq.s32.totalorder %s40, 1
      %p178 = por %p176, %p177
      %p180 = scmp.ne.s32.totalorder %s165, %s179
      %p181 = scmp.eq.s32.totalorder %s40, 0
      %p182 = por %p180, %p181
      %s184 = sadd.s32 %s183, 1
      %p187 = scmp.eq.s32.totalorder %s34, 1
      %p188 = scmp.ne.s32.totalorder %s183, %s185
      %p189 = scmp.eq.s32.totalorder %s34, 0
      %p190 = por %p188, %p189
      %p191 = scmp.ne.s32.totalorder %s183, %s185
      %p192 = scmp.eq.s32.totalorder %s39, 1
      %p193 = por %p191, %p192
      %p194 = scmp.ne.s32.totalorder %s185, %s186
      %p195 = scmp.eq.s32.totalorder %s39, 0
      %p196 = por %p194, %p195
      %p197 = scmp.ne.s32.totalorder %s185, %s186
      %p198 = scmp.eq.s32.totalorder %s40, 1
      %p199 = por %p197, %p198
      %p201 = scmp.ne.s32.totalorder %s186, %s200
      %p202 = scmp.eq.s32.totalorder %s40, 0
      %p203 = por %p201, %p202
      %s205 = sadd.s32 %s204, 1
      %p208 = scmp.eq.s32.totalorder %s34, 1
      %p209 = scmp.ne.s32.totalorder %s204, %s206
      %p210 = scmp.eq.s32.totalorder %s34, 0
      %p211 = por %p209, %p210
      %p212 = scmp.ne.s32.totalorder %s204, %s206
      %p213 = scmp.eq.s32.totalorder %s39, 1
      %p214 = por %p212, %p213
      %p215 = scmp.ne.s32.totalorder %s206, %s207
      %p216 = scmp.eq.s32.totalorder %s39, 0
      %p217 = por %p215, %p216
      %p218 = scmp.ne.s32.totalorder %s206, %s207
      %p219 = scmp.eq.s32.totalorder %s40, 1
      %p220 = por %p218, %p219
      %p222 = scmp.ne.s32.totalorder %s207, %s221
      %p223 = scmp.eq.s32.totalorder %s40, 0
      %p224 = por %p222, %p223
      %s226 = sadd.s32 %s225, 1
      %p229 = scmp.eq.s32.totalorder %s34, 1
      %p230 = scmp.ne.s32.totalorder %s225, %s227
      %p231 = scmp.eq.s32.totalorder %s34, 0
      %p232 = por %p230, %p231
      %p233 = scmp.ne.s32.totalorder %s225, %s227
      %p234 = scmp.eq.s32.totalorder %s39, 1
      %p235 = por %p233, %p234
      %p236 = scmp.ne.s32.totalorder %s227, %s228
      %p237 = scmp.eq.s32.totalorder %s39, 0
      %p238 = por %p236, %p237
      %p239 = scmp.ne.s32.totalorder %s227, %s228
      %p240 = scmp.eq.s32.totalorder %s40, 1
      %p241 = por %p239, %p240
      %p243 = scmp.ne.s32.totalorder %s228, %s242
      %p244 = scmp.eq.s32.totalorder %s40, 0
      %p245 = por %p243, %p244
      %s247 = sadd.s32 %s246, 1
      %p250 = scmp.eq.s32.totalorder %s34, 1
      %p251 = scmp.ne.s32.totalorder %s246, %s248
      %p252 = scmp.eq.s32.totalorder %s34, 0
      %p253 = por %p251, %p252
      %p254 = scmp.ne.s32.totalorder %s246, %s248
      %p255 = scmp.eq.s32.totalorder %s39, 1
      %p256 = por %p254, %p255
      %p257 = scmp.ne.s32.totalorder %s248, %s249
      %p258 = scmp.eq.s32.totalorder %s39, 0
      %p259 = por %p257, %p258
      %p260 = scmp.ne.s32.totalorder %s248, %s249
      %p261 = scmp.eq.s32.totalorder %s40, 1
      %p262 = por %p260, %p261
      %p264 = scmp.ne.s32.totalorder %s249, %s263
      %p265 = scmp.eq.s32.totalorder %s40, 0
      %p266 = por %p264, %p265
      %s268 = sadd.s32 %s267, 1
      %p271 = scmp.eq.s32.totalorder %s34, 1
      %p272 = scmp.ne.s32.totalorder %s267, %s269
      %p273 = scmp.eq.s32.totalorder %s34, 0
      %p274 = por %p272, %p273
      %p275 = scmp.ne.s32.totalorder %s267, %s269
      %p276 = scmp.eq.s32.totalorder %s39, 1
      %p277 = por %p275, %p276
      %p278 = scmp.ne.s32.totalorder %s269, %s270
      %p279 = scmp.eq.s32.totalorder %s39, 0
      %p280 = por %p278, %p279
      %p281 = scmp.ne.s32.totalorder %s269, %s270
      %p282 = scmp.eq.s32.totalorder %s40, 1
      %p283 = por %p281, %p282
      %p285 = scmp.ne.s32.totalorder %s270, %s284
      %p286 = scmp.eq.s32.totalorder %s40, 0
      %p287 = por %p285, %p286
      %s289 = sadd.s32 %s288, 1
      %p292 = scmp.eq.s32.totalorder %s34, 1
      %p293 = scmp.ne.s32.totalorder %s288, %s290
      %p294 = scmp.eq.s32.totalorder %s34, 0
      %p295 = por %p293, %p294
      %p296 = scmp.ne.s32.totalorder %s288, %s290
      %p297 = scmp.eq.s32.totalorder %s39, 1
      %p298 = por %p296, %p297
      %p299 = scmp.ne.s32.totalorder %s290, %s291
      %p300 = scmp.eq.s32.totalorder %s39, 0
      %p301 = por %p299, %p300
      %p302 = scmp.ne.s32.totalorder %s290, %s291
      %p303 = scmp.eq.s32.totalorder %s40, 1
      %p304 = por %p302, %p303
      %p306 = scmp.ne.s32.totalorder %s291, %s305
      %p307 = scmp.eq.s32.totalorder %s40, 0
      %p308 = por %p306, %p307
      %s310 = sadd.s32 %s309, 1
      %p313 = scmp.eq.s32.totalorder %s34, 1
      %p314 = scmp.ne.s32.totalorder %s309, %s311
      %p315 = scmp.eq.s32.totalorder %s34, 0
      %p316 = por %p314, %p315
      %p317 = scmp.ne.s32.totalorder %s309, %s311
      %p318 = scmp.eq.s32.totalorder %s39, 1
      %p319 = por %p317, %p318
      %p320 = scmp.ne.s32.totalorder %s311, %s312
      %p321 = scmp.eq.s32.totalorder %s39, 0
      %p322 = por %p320, %p321
      %p323 = scmp.ne.s32.totalorder %s311, %s312
      %p324 = scmp.eq.s32.totalorder %s40, 1
      %p325 = por %p323, %p324
      %p327 = scmp.ne.s32.totalorder %s312, %s326
      %p328 = scmp.eq.s32.totalorder %s40, 0
      %p329 = por %p327, %p328
      %s331 = sadd.s32 %s330, 1
      %p334 = scmp.eq.s32.totalorder %s34, 1
      %p335 = scmp.ne.s32.totalorder %s330, %s332
      %p336 = scmp.eq.s32.totalorder %s34, 0
      %p337 = por %p335, %p336
      %p338 = scmp.ne.s32.totalorder %s330, %s332
      %p339 = scmp.eq.s32.totalorder %s39, 1
      %p340 = por %p338, %p339
      %p341 = scmp.ne.s32.totalorder %s332, %s333
      %p342 = scmp.eq.s32.totalorder %s39, 0
      %p343 = por %p341, %p342
      %p344 = scmp.ne.s32.totalorder %s332, %s333
      %p345 = scmp.eq.s32.totalorder %s40, 1
      %p346 = por %p344, %p345
      %p348 = scmp.ne.s32.totalorder %s333, %s347
      %p349 = scmp.eq.s32.totalorder %s40, 0
      %p350 = por %p348, %p349
      %s352 = sadd.s32 %s351, 1
      %p355 = scmp.eq.s32.totalorder %s34, 1
      %p356 = scmp.ne.s32.totalorder %s351, %s353
      %p357 = scmp.eq.s32.totalorder %s34, 0
      %p358 = por %p356, %p357
      %p359 = scmp.ne.s32.totalorder %s351, %s353
      %p360 = scmp.eq.s32.totalorder %s39, 1
      %p361 = por %p359, %p360
      %p362 = scmp.ne.s32.totalorder %s353, %s354
      %p363 = scmp.eq.s32.totalorder %s39, 0
      %p364 = por %p362, %p363
      %p365 = scmp.ne.s32.totalorder %s353, %s354
      %p366 = scmp.eq.s32.totalorder %s40, 1
      %p367 = por %p365, %p366
      %p369 = scmp.ne.s32.totalorder %s354, %s368
      %p370 = scmp.eq.s32.totalorder %s40, 0
      %p371 = por %p369, %p370
      %s373 = sadd.s32 %s372, 1
      %p376 = scmp.eq.s32.totalorder %s34, 1
      %p377 = scmp.ne.s32.totalorder %s372, %s374
      %p378 = scmp.eq.s32.totalorder %s34, 0
      %p379 = por %p377, %p378
      %p380 = scmp.ne.s32.totalorder %s372, %s374
      %p381 = scmp.eq.s32.totalorder %s39, 1
      %p382 = por %p380, %p381
      %p383 = scmp.ne.s32.totalorder %s374, %s375
      %p384 = scmp.eq.s32.totalorder %s39, 0
      %p385 = por %p383, %p384
      %p386 = scmp.ne.s32.totalorder %s374, %s375
      %p387 = scmp.eq.s32.totalorder %s40, 1
      %p388 = por %p386, %p387
      %p390 = scmp.ne.s32.totalorder %s375, %s389
      %p391 = scmp.eq.s32.totalorder %s40, 0
      %p392 = por %p390, %p391
      %s394 = sadd.s32 %s393, 1
      %p397 = scmp.eq.s32.totalorder %s34, 1
      %p398 = scmp.ne.s32.totalorder %s393, %s395
      %p399 = scmp.eq.s32.totalorder %s34, 0
      %p400 = por %p398, %p399
      %p401 = scmp.ne.s32.totalorder %s393, %s395
      %p402 = scmp.eq.s32.totalorder %s39, 1
      %p403 = por %p401, %p402
      %p404 = scmp.ne.s32.totalorder %s395, %s396
      %p405 = scmp.eq.s32.totalorder %s39, 0
      %p406 = por %p404, %p405
      %p407 = scmp.ne.s32.totalorder %s395, %s396
      %p408 = scmp.eq.s32.totalorder %s40, 1
      %p409 = por %p407, %p408
      %p411 = scmp.ne.s32.totalorder %s396, %s410
      %p412 = scmp.eq.s32.totalorder %s40, 0
      %p413 = por %p411, %p412
      %s415 = sadd.s32 %s414, 1
      %p418 = scmp.eq.s32.totalorder %s34, 1
      %p419 = scmp.ne.s32.totalorder %s414, %s416
      %p420 = scmp.eq.s32.totalorder %s34, 0
      %p421 = por %p419, %p420
      %p422 = scmp.ne.s32.totalorder %s414, %s416
      %p423 = scmp.eq.s32.totalorder %s39, 1
      %p424 = por %p422, %p423
      %p425 = scmp.ne.s32.totalorder %s416, %s417
      %p426 = scmp.eq.s32.totalorder %s39, 0
      %p427 = por %p425, %p426
      %p428 = scmp.ne.s32.totalorder %s416, %s417
      %p429 = scmp.eq.s32.totalorder %s40, 1
      %p430 = por %p428, %p429
      %p432 = scmp.ne.s32.totalorder %s417, %s431
      %p433 = scmp.eq.s32.totalorder %s40, 0
      %p434 = por %p432, %p433
      %s436 = sadd.s32 %s435, 1
      %p439 = scmp.eq.s32.totalorder %s34, 1
      %p440 = scmp.ne.s32.totalorder %s435, %s437
      %p441 = scmp.eq.s32.totalorder %s34, 0
      %p442 = por %p440, %p441
      %p443 = scmp.ne.s32.totalorder %s435, %s437
      %p444 = scmp.eq.s32.totalorder %s39, 1
      %p445 = por %p443, %p444
      %p446 = scmp.ne.s32.totalorder %s437, %s438
      %p447 = scmp.eq.s32.totalorder %s39, 0
      %p448 = por %p446, %p447
      %p449 = scmp.ne.s32.totalorder %s437, %s438
      %p450 = scmp.eq.s32.totalorder %s40, 1
      %p451 = por %p449, %p450
      %p453 = scmp.ne.s32.totalorder %s438, %s452
      %p454 = scmp.eq.s32.totalorder %s40, 0
      %p455 = por %p453, %p454
      %s457 = sadd.s32 %s456, 1
      %p460 = scmp.eq.s32.totalorder %s34, 1
      %p461 = scmp.ne.s32.totalorder %s456, %s458
      %p462 = scmp.eq.s32.totalorder %s34, 0
      %p463 = por %p461, %p462
      %p464 = scmp.ne.s32.totalorder %s456, %s458
      %p465 = scmp.eq.s32.totalorder %s39, 1
      %p466 = por %p464, %p465
      %p467 = scmp.ne.s32.totalorder %s458, %s459
      %p468 = scmp.eq.s32.totalorder %s39, 0
      %p469 = por %p467, %p468
      %p470 = scmp.ne.s32.totalorder %s458, %s459
      %p471 = scmp.eq.s32.totalorder %s40, 1
      %p472 = por %p470, %p471
      %p474 = scmp.ne.s32.totalorder %s459, %s473
      %p475 = scmp.eq.s32.totalorder %s40, 0
      %p476 = por %p474, %p475
      %s478 = sadd.s32 %s477, 1
      %p481 = scmp.eq.s32.totalorder %s34, 1
      %p482 = scmp.ne.s32.totalorder %s477, %s479
      %p483 = scmp.eq.s32.totalorder %s34, 0
      %p484 = por %p482, %p483
      %p485 = scmp.ne.s32.totalorder %s477, %s479
      %p486 = scmp.eq.s32.totalorder %s39, 1
      %p487 = por %p485, %p486
      %p488 = scmp.ne.s32.totalorder %s479, %s480
      %p489 = scmp.eq.s32.totalorder %s39, 0
      %p490 = por %p488, %p489
      %p491 = scmp.ne.s32.totalorder %s479, %s480
      %p492 = scmp.eq.s32.totalorder %s40, 1
      %p493 = por %p491, %p492
      %p495 = scmp.ne.s32.totalorder %s480, %s494
      %p496 = scmp.eq.s32.totalorder %s40, 0
      %p497 = por %p495, %p496
      %s499 = sadd.s32 %s498, 1
      %p502 = scmp.eq.s32.totalorder %s34, 1
      %p503 = scmp.ne.s32.totalorder %s498, %s500
      %p504 = scmp.eq.s32.totalorder %s34, 0
      %p505 = por %p503, %p504
      %p506 = scmp.ne.s32.totalorder %s498, %s500
      %p507 = scmp.eq.s32.totalorder %s39, 1
      %p508 = por %p506, %p507
      %p509 = scmp.ne.s32.totalorder %s500, %s501
      %p510 = scmp.eq.s32.totalorder %s39, 0
      %p511 = por %p509, %p510
      %p512 = scmp.ne.s32.totalorder %s500, %s501
      %p513 = scmp.eq.s32.totalorder %s40, 1
      %p514 = por %p512, %p513
      %p516 = scmp.ne.s32.totalorder %s501, %s515
      %p517 = scmp.eq.s32.totalorder %s40, 0
      %p518 = por %p516, %p517
      %s520 = sadd.s32 %s519, 1
      %p523 = scmp.eq.s32.totalorder %s34, 1
      %p524 = scmp.ne.s32.totalorder %s519, %s521
      %p525 = scmp.eq.s32.totalorder %s34, 0
      %p526 = por %p524, %p525
      %p527 = scmp.ne.s32.totalorder %s519, %s521
      %p528 = scmp.eq.s32.totalorder %s39, 1
      %p529 = por %p527, %p528
      %p530 = scmp.ne.s32.totalorder %s521, %s522
      %p531 = scmp.eq.s32.totalorder %s39, 0
      %p532 = por %p530, %p531
      %p533 = scmp.ne.s32.totalorder %s521, %s522
      %p534 = scmp.eq.s32.totalorder %s40, 1
      %p535 = por %p533, %p534
      %p537 = scmp.ne.s32.totalorder %s522, %s536
      %p538 = scmp.eq.s32.totalorder %s40, 0
      %p539 = por %p537, %p538
      %s541 = sadd.s32 %s540, 1
      %p544 = scmp.eq.s32.totalorder %s34, 1
      %p545 = scmp.ne.s32.totalorder %s540, %s542
      %p546 = scmp.eq.s32.totalorder %s34, 0
      %p547 = por %p545, %p546
      %p548 = scmp.ne.s32.totalorder %s540, %s542
      %p549 = scmp.eq.s32.totalorder %s39, 1
      %p550 = por %p548, %p549
      %p551 = scmp.ne.s32.totalorder %s542, %s543
      %p552 = scmp.eq.s32.totalorder %s39, 0
      %p553 = por %p551, %p552
      %p554 = scmp.ne.s32.totalorder %s542, %s543
      %p555 = scmp.eq.s32.totalorder %s40, 1
      %p556 = por %p554, %p555
      %p558 = scmp.ne.s32.totalorder %s543, %s557
      %p559 = scmp.eq.s32.totalorder %s40, 0
      %p560 = por %p558, %p559
      %s562 = sadd.s32 %s561, 1
      %p565 = scmp.eq.s32.totalorder %s34, 1
      %p566 = scmp.ne.s32.totalorder %s561, %s563
      %p567 = scmp.eq.s32.totalorder %s34, 0
      %p568 = por %p566, %p567
      %p569 = scmp.ne.s32.totalorder %s561, %s563
      %p570 = scmp.eq.s32.totalorder %s39, 1
      %p571 = por %p569, %p570
      %p572 = scmp.ne.s32.totalorder %s563, %s564
      %p573 = scmp.eq.s32.totalorder %s39, 0
      %p574 = por %p572, %p573
      %p575 = scmp.ne.s32.totalorder %s563, %s564
      %p576 = scmp.eq.s32.totalorder %s40, 1
      %p577 = por %p575, %p576
      %p579 = scmp.ne.s32.totalorder %s564, %s578
      %p580 = scmp.eq.s32.totalorder %s40, 0
      %p581 = por %p579, %p580
      %s582 = ssub.s32 %s34, %s41
      %p583 = scmp.eq.s32.totalorder %s582, 0
      %s585 = sadd.s32 %s584, 1
      %s586 = scalar_select %p583, %s584, %s585
      %p589 = pneg %p583
      %p590 = scmp.eq.s32.totalorder %s34, 1
      %p591 = por %p589, %p590
      %p592 = scmp.ne.s32.totalorder %s584, %s587
      %p593 = scmp.eq.s32.totalorder %s34, 0
      %p594 = por %p592, %p593
      %p595 = scmp.ne.s32.totalorder %s584, %s587
      %p596 = scmp.eq.s32.totalorder %s39, 1
      %p597 = por %p595, %p596
      %p598 = scmp.ne.s32.totalorder %s587, %s588
      %p599 = scmp.eq.s32.totalorder %s39, 0
      %p600 = por %p598, %p599
      %p601 = scmp.ne.s32.totalorder %s587, %s588
      %p602 = scmp.eq.s32.totalorder %s40, 1
      %p603 = por %p601, %p602
      %p605 = scmp.ne.s32.totalorder %s588, %s604
      %p606 = scmp.eq.s32.totalorder %s40, 0
      %p607 = por %p605, %p606
      %p608 = scmp.le.s32.totalorder 1, %s34
      %p609 = scmp.lt.s32.totalorder %s34, 3
      %p610 = pnand %p608, %p609
      %p611 = pneg %p610
      // Predicated region
      $region9: #{tpu_custom_call.1} parent=5 // pred_check
        _
      $region10: #{tpu_custom_call.1} parent=5 // pred_check_branch
        %613 = sbr.rel (%p610) target = $region12
      $region11: #{tpu_custom_call.1} parent=5 // pred_region
        %s614 = ssub.s32 %s34, 1
        // Predicated region
        $region13: #{tpu_custom_call.1} parent=11 // pred_check
          %p615 = pneg %p133
        $region14: #{tpu_custom_call.1} parent=11 // pred_check_branch
          %617 = sbr.rel (%p615) target = $region16
        $region15: #{tpu_custom_call.1} parent=11 // pred_region
          _
        $region16: #{tpu_custom_call.1} parent=11 // pred_fallthru
          _
        // Predicated region
        $region17: #{tpu_custom_call.1} parent=11 // pred_check
          %p618 = pneg %p154
        $region18: #{tpu_custom_call.1} parent=11 // pred_check_branch
          %620 = sbr.rel (%p618) target = $region20
        $region19: #{tpu_custom_call.1} parent=11 // pred_region
          _
        $region20: #{tpu_custom_call.1} parent=11 // pred_fallthru
          _
        // Predicated region
        $region21: #{tpu_custom_call.1} parent=11 // pred_check
          %p621 = pneg %p175
        $region22: #{tpu_custom_call.1} parent=11 // pred_check_branch
          %623 = sbr.rel (%p621) target = $region24
        $region23: #{tpu_custom_call.1} parent=11 // pred_region
          _
        $region24: #{tpu_custom_call.1} parent=11 // pred_fallthru
          _
        // Predicated region
        $region25: #{tpu_custom_call.1} parent=11 // pred_check
          %p624 = pneg %p196
        $region26: #{tpu_custom_call.1} parent=11 // pred_check_branch
          %626 = sbr.rel (%p624) target = $region28
        $region27: #{tpu_custom_call.1} parent=11 // pred_region
          _
        $region28: #{tpu_custom_call.1} parent=11 // pred_fallthru
          _
        // Predicated region
        $region29: #{tpu_custom_call.1} parent=11 // pred_check
          %p627 = pneg %p217
        $region30: #{tpu_custom_call.1} parent=11 // pred_check_branch
          %629 = sbr.rel (%p627) target = $region32
        $region31: #{tpu_custom_call.1} parent=11 // pred_region
          _
        $region32: #{tpu_custom_call.1} parent=11 // pred_fallthru
          _
        // Predicated region
        $region33: #{tpu_custom_call.1} parent=11 // pred_check
          %p630 = pneg %p238
        $region34: #{tpu_custom_call.1} parent=11 // pred_check_branch
          %632 = sbr.rel (%p630) target = $region36
        $region35: #{tpu_custom_call.1} parent=11 // pred_region
          _
        $region36: #{tpu_custom_call.1} parent=11 // pred_fallthru
          _
        // Predicated region
        $region37: #{tpu_custom_call.1} parent=11 // pred_check
          %p633 = pneg %p259
        $region38: #{tpu_custom_call.1} parent=11 // pred_check_branch
          %635 = sbr.rel (%p633) target = $region40
        $region39: #{tpu_custom_call.1} parent=11 // pred_region
          _
        $region40: #{tpu_custom_call.1} parent=11 // pred_fallthru
          _
        // Predicated region
        $region41: #{tpu_custom_call.1} parent=11 // pred_check
          %p636 = pneg %p280
        $region42: #{tpu_custom_call.1} parent=11 // pred_check_branch
          %638 = sbr.rel (%p636) target = $region44
        $region43: #{tpu_custom_call.1} parent=11 // pred_region
          _
        $region44: #{tpu_custom_call.1} parent=11 // pred_fallthru
          _
        // Predicated region
        $region45: #{tpu_custom_call.1} parent=11 // pred_check
          %p639 = pneg %p301
        $region46: #{tpu_custom_call.1} parent=11 // pred_check_branch
          %641 = sbr.rel (%p639) target = $region48
        $region47: #{tpu_custom_call.1} parent=11 // pred_region
          _
        $region48: #{tpu_custom_call.1} parent=11 // pred_fallthru
          _
        // Predicated region
        $region49: #{tpu_custom_call.1} parent=11 // pred_check
          %p642 = pneg %p322
        $region50: #{tpu_custom_call.1} parent=11 // pred_check_branch
          %644 = sbr.rel (%p642) target = $region52
        $region51: #{tpu_custom_call.1} parent=11 // pred_region
          _
        $region52: #{tpu_custom_call.1} parent=11 // pred_fallthru
          _
        // Predicated region
        $region53: #{tpu_custom_call.1} parent=11 // pred_check
          %p645 = pneg %p343
        $region54: #{tpu_custom_call.1} parent=11 // pred_check_branch
          %647 = sbr.rel (%p645) target = $region56
        $region55: #{tpu_custom_call.1} parent=11 // pred_region
          _
        $region56: #{tpu_custom_call.1} parent=11 // pred_fallthru
          _
        // Predicated region
        $region57: #{tpu_custom_call.1} parent=11 // pred_check
          %p648 = pneg %p364
        $region58: #{tpu_custom_call.1} parent=11 // pred_check_branch
          %650 = sbr.rel (%p648) target = $region60
        $region59: #{tpu_custom_call.1} parent=11 // pred_region
          _
        $region60: #{tpu_custom_call.1} parent=11 // pred_fallthru
          _
        // Predicated region
        $region61: #{tpu_custom_call.1} parent=11 // pred_check
          %p651 = pneg %p385
        $region62: #{tpu_custom_call.1} parent=11 // pred_check_branch
          %653 = sbr.rel (%p651) target = $region64
        $region63: #{tpu_custom_call.1} parent=11 // pred_region
          _
        $region64: #{tpu_custom_call.1} parent=11 // pred_fallthru
          _
        // Predicated region
        $region65: #{tpu_custom_call.1} parent=11 // pred_check
          %p654 = pneg %p406
        $region66: #{tpu_custom_call.1} parent=11 // pred_check_branch
          %656 = sbr.rel (%p654) target = $region68
        $region67: #{tpu_custom_call.1} parent=11 // pred_region
          _
        $region68: #{tpu_custom_call.1} parent=11 // pred_fallthru
          _
        // Predicated region
        $region69: #{tpu_custom_call.1} parent=11 // pred_check
          %p657 = pneg %p427
        $region70: #{tpu_custom_call.1} parent=11 // pred_check_branch
          %659 = sbr.rel (%p657) target = $region72
        $region71: #{tpu_custom_call.1} parent=11 // pred_region
          _
        $region72: #{tpu_custom_call.1} parent=11 // pred_fallthru
          _
        // Predicated region
        $region73: #{tpu_custom_call.1} parent=11 // pred_check
          %p660 = pneg %p448
        $region74: #{tpu_custom_call.1} parent=11 // pred_check_branch
          %662 = sbr.rel (%p660) target = $region76
        $region75: #{tpu_custom_call.1} parent=11 // pred_region
          _
        $region76: #{tpu_custom_call.1} parent=11 // pred_fallthru
          _
        // Predicated region
        $region77: #{tpu_custom_call.1} parent=11 // pred_check
          %p663 = pneg %p469
        $region78: #{tpu_custom_call.1} parent=11 // pred_check_branch
          %665 = sbr.rel (%p663) target = $region80
        $region79: #{tpu_custom_call.1} parent=11 // pred_region
          _
        $region80: #{tpu_custom_call.1} parent=11 // pred_fallthru
          _
        // Predicated region
        $region81: #{tpu_custom_call.1} parent=11 // pred_check
          %p666 = pneg %p490
        $region82: #{tpu_custom_call.1} parent=11 // pred_check_branch
          %668 = sbr.rel (%p666) target = $region84
        $region83: #{tpu_custom_call.1} parent=11 // pred_region
          _
        $region84: #{tpu_custom_call.1} parent=11 // pred_fallthru
          _
        // Predicated region
        $region85: #{tpu_custom_call.1} parent=11 // pred_check
          %p669 = pneg %p511
        $region86: #{tpu_custom_call.1} parent=11 // pred_check_branch
          %671 = sbr.rel (%p669) target = $region88
        $region87: #{tpu_custom_call.1} parent=11 // pred_region
          _
        $region88: #{tpu_custom_call.1} parent=11 // pred_fallthru
          _
        // Predicated region
        $region89: #{tpu_custom_call.1} parent=11 // pred_check
          %p672 = pneg %p532
        $region90: #{tpu_custom_call.1} parent=11 // pred_check_branch
          %674 = sbr.rel (%p672) target = $region92
        $region91: #{tpu_custom_call.1} parent=11 // pred_region
          _
        $region92: #{tpu_custom_call.1} parent=11 // pred_fallthru
          _
        // Predicated region
        $region93: #{tpu_custom_call.1} parent=11 // pred_check
          %p675 = pneg %p553
        $region94: #{tpu_custom_call.1} parent=11 // pred_check_branch
          %677 = sbr.rel (%p675) target = $region96
        $region95: #{tpu_custom_call.1} parent=11 // pred_region
          _
        $region96: #{tpu_custom_call.1} parent=11 // pred_fallthru
          _
        // Predicated region
        $region97: #{tpu_custom_call.1} parent=11 // pred_check
          %p678 = pneg %p574
        $region98: #{tpu_custom_call.1} parent=11 // pred_check_branch
          %680 = sbr.rel (%p678) target = $region100
        $region99: #{tpu_custom_call.1} parent=11 // pred_region
          _
        $region100: #{tpu_custom_call.1} parent=11 // pred_fallthru
          _
      $region12: #{tpu_custom_call.1} parent=5 // pred_fallthru
        _
      %p681 = scmp.lt.s32.totalorder %s34, 2
      // Predicated region
      $region101: #{tpu_custom_call.1} parent=5 // pred_check
        %p682 = pneg %p681
      $region102: #{tpu_custom_call.1} parent=5 // pred_check_branch
        %684 = sbr.rel (%p682) target = $region104
      $region103: #{tpu_custom_call.1} parent=5 // pred_region
        // Predicated region
        $region105: #{tpu_custom_call.1} parent=103 // pred_check
          %p685 = pneg %p54
        $region106: #{tpu_custom_call.1} parent=103 // pred_check_branch
          %687 = sbr.rel (%p685) target = $region108
        $region107: #{tpu_custom_call.1} parent=103 // pred_region
          %p688 = scmp.lt.s32.totalorder %s34, 1
          %s689 = scalar_select %p688, %s34, 1
          %s690 = smul.addr %s689, 2
          %s691 = smul.addr %s690, 4
          %s692 = scalar_lea.vmem %s0, %s691
        $region108: #{tpu_custom_call.1} parent=103 // pred_fallthru
          _
        // Predicated region
        $region109: #{tpu_custom_call.1} parent=103 // pred_check
          %p693 = pneg %p80
        $region110: #{tpu_custom_call.1} parent=103 // pred_check_branch
          %695 = sbr.rel (%p693) target = $region112
        $region111: #{tpu_custom_call.1} parent=103 // pred_region
          %p696 = scmp.lt.s32.totalorder %s34, 1
          %s697 = scalar_select %p696, %s34, 1
          %s698 = smul.addr %s697, 2
          %s699 = smul.addr %s698, 8
          %s700 = scalar_lea.vmem %s1, %s699
        $region112: #{tpu_custom_call.1} parent=103 // pred_fallthru
          _
        // Predicated region
        $region113: #{tpu_custom_call.1} parent=103 // pred_check
          %p701 = pneg %p106
        $region114: #{tpu_custom_call.1} parent=103 // pred_check_branch
          %703 = sbr.rel (%p701) target = $region116
        $region115: #{tpu_custom_call.1} parent=103 // pred_region
          %p704 = scmp.lt.s32.totalorder %s34, 1
          %s705 = scalar_select %p704, %s34, 1
          %s706 = smul.addr %s705, 2
          %s707 = smul.addr %s706, 8
          %s708 = scalar_lea.vmem %s2, %s707
        $region116: #{tpu_custom_call.1} parent=103 // pred_fallthru
          _
      $region104: #{tpu_custom_call.1} parent=5 // pred_fallthru
        _
      %p709 = scmp.le.s32.totalorder 1, %s34
      %p710 = scmp.lt.s32.totalorder %s34, 3
      %p711 = pnand %p709, %p710
      %p712 = pneg %p711
      // Predicated region
      $region117: #{tpu_custom_call.1} parent=5 // pred_check
        _
      $region118: #{tpu_custom_call.1} parent=5 // pred_check_branch
        %714 = sbr.rel (%p711) target = $region120
      $region119: #{tpu_custom_call.1} parent=5 // pred_region
        %s715 = ssub.s32 %s34, 1
        %p716 = scmp.lt.s32.totalorder %s39, 1
        %s717 = scalar_select %p716, %s39, 1
        %s718 = smul.addr %s717, 2
        %s719 = smul.addr %s718, 4
        %s720 = scalar_lea.vmem %s0, %s719
        %p721 = pneg %p60
        %p722 = pneg %p57
        %p723 = scmp.lt.s32.totalorder %s39, 1
        %s724 = scalar_select %p723, %s39, 1
        %s725 = smul.addr %s724, 2
        %s726 = smul.addr %s725, 8
        %s727 = scalar_lea.vmem %s1, %s726
        %p728 = pneg %p86
        %p729 = pneg %p83
        %p730 = scmp.lt.s32.totalorder %s39, 1
        %s731 = scalar_select %p730, %s39, 1
        %s732 = smul.addr %s731, 2
        %s733 = smul.addr %s732, 8
        %s734 = scalar_lea.vmem %s2, %s733
        %p735 = pneg %p112
        %p736 = pneg %p109
        %p737 = pneg %p133
        %p738 = pneg %p130
        %p739 = pneg %p154
        %p740 = pneg %p151
        %p741 = pneg %p175
        %p742 = pneg %p172
        %p743 = pneg %p196
        %p744 = pneg %p193
        %p745 = pneg %p217
        %p746 = pneg %p214
        %p747 = pneg %p238
        %p748 = pneg %p235
        %p749 = pneg %p259
        %p750 = pneg %p256
        %p751 = pneg %p280
        %p752 = pneg %p277
        %p753 = pneg %p301
        %p754 = pneg %p298
        %p755 = pneg %p322
        %p756 = pneg %p319
        %p757 = pneg %p343
        %p758 = pneg %p340
        %p759 = pneg %p364
        %p760 = pneg %p361
        %p761 = pneg %p385
        %p762 = pneg %p382
        %p763 = pneg %p406
        %p764 = pneg %p403
        %p765 = pneg %p427
        %p766 = pneg %p424
        %p767 = pneg %p448
        %p768 = pneg %p445
        %p769 = pneg %p469
        %p770 = pneg %p466
        %p771 = pneg %p490
        %p772 = pneg %p487
        %p773 = pneg %p511
        %p774 = pneg %p508
        %p775 = pneg %p532
        %p776 = pneg %p529
        %p777 = pneg %p553
        %p778 = pneg %p550
        %p779 = pneg %p574
        %p780 = pneg %p571
        %p781 = pneg %p600
        %p782 = pneg %p597
        %s783 = sand.u32 %s587, 1
        %s784 = scalar_lea.sflag [#allocation3], %s783
        %s785 = sand.u32 %s587, 1
        %s786 = scalar_lea.vmem [#allocation2], %s785
        %p787 = scmp.lt.s32.totalorder %s39, 1
        %s788 = scalar_select %p787, %s39, 1
        %s789 = smul.addr %s788, 2
        %s790 = smul.addr %s789, 4
        %s791 = scalar_lea.vmem %s0, %s790
        %p792 = scmp.lt.s32.totalorder %s39, 1
        %s793 = scalar_select %p792, %s39, 1
        %s794 = smul.addr %s793, 2
        %s795 = smul.addr %s794, 8
        %s796 = scalar_lea.vmem %s1, %s795
        %p797 = scmp.lt.s32.totalorder %s39, 1
        %s798 = scalar_select %p797, %s39, 1
        %s799 = smul.addr %s798, 2
        %s800 = smul.addr %s799, 8
        %s801 = scalar_lea.vmem %s2, %s800
        %v803 = vld [vmem:[%s791] sm:$0xf]
        %v804 = vld [vmem:[%s791 + $0x4] sm:$0xf]
        %v805 = vld [vmem:[%s796] sm:$0xff]
        %v806 = vld [vmem:[%s796 + $0x8] sm:$0xff]
        %v807 = vld [vmem:[%s801] sm:$0xff]
        %v808 = vld [vmem:[%s801 + $0x8] sm:$0xff]
        %v809 = vld [vmem:[%s3] sm:$0xf]
        %v810 = vld [vmem:[%s3 + $0x4] sm:$0xf]
        %v811 = vld [vmem:[%s4] sm:$0x1]
        %v812 = vld [vmem:[%s5] sm:$0xf]
        %v813 = vld [vmem:[%s5 + $0x4] sm:$0xf]
        %v814 = vld [vmem:[%s5 + $0x8] sm:$0xf]
        %v815 = vld [vmem:[%s5 + $0xc] sm:$0xf]
        %v816 = vld [vmem:[%s5 + $0x10] sm:$0xf]
        %v817 = vld [vmem:[%s5 + $0x14] sm:$0xf]
        %v818 = vld [vmem:[%s6] sm:$0x1]
        %v819 = vpack.c.bf16 %v806, %v805
        %v822 = vunpack.c.l.b16 %v803
        %v823 = vunpack.c.l.b16 %v804
        %v824 = vpack.c.b16 %v823, %v822
        %vm825 = vcmask 130048
        %v827 = vsel %vm825, %v824, 0
        %829 = vmatprep.subr.bf16.mxu0 0
        %830 = vmatpush1.bf16.msra.mxu0 %v819
        %831 = vmatprep.subr.bf16.mxu0 0
        %832 = vmatpush1.bf16.msra.mxu0 0
        %833 = vmatprep.subr.bf16.mxu0 0
        %834 = vmatpush1.bf16.msra.mxu0 0
        %835 = vmatprep.subr.bf16.mxu0 0
        %836 = vmatpush1.bf16.msra.mxu0 0
        %837 = vmatprep.subr.bf16.mxu0 0
        %838 = vmatpush1.bf16.msra.mxu0 0
        %839 = vmatprep.subr.bf16.mxu0 0
        %840 = vmatpush1.bf16.msra.mxu0 0
        %841 = vmatprep.subr.bf16.mxu0 0
        %842 = vmatpush1.bf16.msra.mxu0 0
        %843 = vmatprep.subr.bf16.mxu0 0
        %844 = vmatpush1.bf16.msra.mxu0 0
        %845 = vmatprep.subr.bf16.mxu0 0
        %846 = vmatpush1.bf16.msra.mxu0 0
        %847 = vmatprep.subr.bf16.mxu0 0
        %848 = vmatpush1.bf16.msra.mxu0 0
        %849 = vmatprep.subr.bf16.mxu0 0
        %850 = vmatpush1.bf16.msra.mxu0 0
        %851 = vmatprep.subr.bf16.mxu0 0
        %852 = vmatpush1.bf16.msra.mxu0 0
        %853 = vmatprep.subr.bf16.mxu0 0
        %854 = vmatpush1.bf16.msra.mxu0 0
        %855 = vmatprep.subr.bf16.mxu0 0
        %856 = vmatpush1.bf16.msra.mxu0 0
        %857 = vmatprep.subr.bf16.mxu0 0
        %858 = vmatpush1.bf16.msra.mxu0 0
        %859 = vmatprep.subr.bf16.mxu0 0
        %860 = vmatpush1.bf16.msra.mxu0 0
        %861 = vmatprep.mubr.bf16.mxu0 0
        %862 = vmatmul.mubr.bf16.gmra.mrb[0].mxu0 %v827
        %v863 = vpop.f32.mrb[0].mxu0
        %v864 = vadd.f32 0.0, %v863
        %v865 = vpop.f32.mrb[0].mxu0
        %v866 = vpop.f32.mrb[0].mxu0
        %v867 = vadd.f32 0.0, %v866
        %v868 = vpop.f32.mrb[0].mxu0
        %869 = vdwg.mxu0
        %v870 = vadd.f32 %v805, %v864
        %v871 = vadd.f32 %v806, %v867
        %v872 = vpack.c.bf16 %v871, %v870
        %v874 = vlaneseq
        %v875 = vshrl.u32 %v874, 7
        %v876 = vsub.s32 0, %v875
        %v877 = vrot.slane %v811, %v876
        %v881 = vunpack.c.l.b16 %v809
        %v882 = vunpack.c.l.b16 %v810
        %v883 = vpack.c.b16 %v882, %v881
        %v886 = vsel %vm825, %v872, 0
        %888 = vmatprep.subr.bf16.mxu0 0
        %889 = vmatpush1.bf16.msra.mxu0 %v883
        %890 = vmatprep.subr.bf16.mxu0 0
        %891 = vmatpush1.bf16.msra.mxu0 0
        %892 = vmatprep.subr.bf16.mxu0 0
        %893 = vmatpush1.bf16.msra.mxu0 0
        %894 = vmatprep.subr.bf16.mxu0 0
        %895 = vmatpush1.bf16.msra.mxu0 0
        %896 = vmatprep.subr.bf16.mxu0 0
        %897 = vmatpush1.bf16.msra.mxu0 0
        %898 = vmatprep.subr.bf16.mxu0 0
        %899 = vmatpush1.bf16.msra.mxu0 0
        %900 = vmatprep.subr.bf16.mxu0 0
        %901 = vmatpush1.bf16.msra.mxu0 0
        %902 = vmatprep.subr.bf16.mxu0 0
        %903 = vmatpush1.bf16.msra.mxu0 0
        %904 = vmatprep.subr.bf16.mxu0 0
        %905 = vmatpush1.bf16.msra.mxu0 0
        %906 = vmatprep.subr.bf16.mxu0 0
        %907 = vmatpush1.bf16.msra.mxu0 0
        %908 = vmatprep.subr.bf16.mxu0 0
        %909 = vmatpush1.bf16.msra.mxu0 0
        %910 = vmatprep.subr.bf16.mxu0 0
        %911 = vmatpush1.bf16.msra.mxu0 0
        %912 = vmatprep.subr.bf16.mxu0 0
        %913 = vmatpush1.bf16.msra.mxu0 0
        %914 = vmatprep.subr.bf16.mxu0 0
        %915 = vmatpush1.bf16.msra.mxu0 0
        %916 = vmatprep.subr.bf16.mxu0 0
        %917 = vmatpush1.bf16.msra.mxu0 0
        %918 = vmatprep.subr.bf16.mxu0 0
        %919 = vmatpush1.bf16.msra.mxu0 0
        %920 = vmatprep.mubr.bf16.mxu0 0
        %921 = vmatmul.mubr.bf16.gmra.mrb[0].mxu0 %v886
        %v922 = vpop.f32.mrb[0].mxu0
        %v923 = vadd.f32 %v877, %v922
        %v924 = vpop.f32.mrb[0].mxu0
        %v925 = vpop.f32.mrb[0].mxu0
        %v926 = vadd.f32 %v877, %v925
        %v927 = vpop.f32.mrb[0].mxu0
        %928 = vdwg.mxu0
        %v929 = vmax.f32 %v923, 0.0
        %v930 = vmax.f32 %v926, 0.0
        %v931 = vpack.c.bf16 %v930, %v929
        %v933 = vlaneseq
        %v934 = vshrl.u32 %v933, 7
        %v935 = vsub.s32 0, %v934
        %v936 = vrot.slane %v818, %v935
        %v944 = vunpack.c.l.b16 %v812
        %v945 = vunpack.c.l.b16 %v813
        %v946 = vunpack.c.l.b16 %v814
        %v947 = vunpack.c.l.b16 %v815
        %v948 = vunpack.c.l.b16 %v816
        %v949 = vunpack.c.l.b16 %v817
        %v950 = vpack.c.b16 %v945, %v944
        %v951 = vpack.c.b16 %v947, %v946
        %v952 = vpack.c.b16 %v949, %v948
        %vm956 = vcmask 392192
        %v958 = vsel %vm956, %v931, 0
        %960 = vmatprep.subr.bf16.mxu0 0
        %961 = vmatpush1.bf16.msra.mxu0 %v950
        %962 = vmatprep.subr.bf16.mxu0 0
        %963 = vmatpush1.bf16.msra.mxu0 %v951
        %964 = vmatprep.subr.bf16.mxu0 0
        %965 = vmatpush1.bf16.msra.mxu0 %v952
        %966 = vmatprep.subr.bf16.mxu0 0
        %967 = vmatpush1.bf16.msra.mxu0 0
        %968 = vmatprep.subr.bf16.mxu0 0
        %969 = vmatpush1.bf16.msra.mxu0 0
        %970 = vmatprep.subr.bf16.mxu0 0
        %971 = vmatpush1.bf16.msra.mxu0 0
        %972 = vmatprep.subr.bf16.mxu0 0
        %973 = vmatpush1.bf16.msra.mxu0 0
        %974 = vmatprep.subr.bf16.mxu0 0
        %975 = vmatpush1.bf16.msra.mxu0 0
        %976 = vmatprep.subr.bf16.mxu0 0
        %977 = vmatpush1.bf16.msra.mxu0 0
        %978 = vmatprep.subr.bf16.mxu0 0
        %979 = vmatpush1.bf16.msra.mxu0 0
        %980 = vmatprep.subr.bf16.mxu0 0
        %981 = vmatpush1.bf16.msra.mxu0 0
        %982 = vmatprep.subr.bf16.mxu0 0
        %983 = vmatpush1.bf16.msra.mxu0 0
        %984 = vmatprep.subr.bf16.mxu0 0
        %985 = vmatpush1.bf16.msra.mxu0 0
        %986 = vmatprep.subr.bf16.mxu0 0
        %987 = vmatpush1.bf16.msra.mxu0 0
        %988 = vmatprep.subr.bf16.mxu0 0
        %989 = vmatpush1.bf16.msra.mxu0 0
        %990 = vmatprep.subr.bf16.mxu0 0
        %991 = vmatpush1.bf16.msra.mxu0 0
        %992 = vmatprep.mubr.bf16.mxu0 0
        %993 = vmatmul.mubr.bf16.gmra.mrb[0].mxu0 %v958
        %v994 = vpop.f32.mrb[0].mxu0
        %v995 = vadd.f32 %v936, %v994
        %v996 = vpop.f32.mrb[0].mxu0
        %v997 = vpop.f32.mrb[0].mxu0
        %v998 = vadd.f32 %v936, %v997
        %v999 = vpop.f32.mrb[0].mxu0
        %1000 = vdwg.mxu0
        %v1001 = vmax.f32 %v995, 0.0
        %v1002 = vmax.f32 %v998, 0.0
        %v1003 = vtanh.pop %v1001
        %v1004 = vtanh.pop %v1002
        %v1005 = vld [vmem:[%s7] sm:$0xf]
        %v1006 = vld [vmem:[%s7 + $0x4] sm:$0xf]
        %v1007 = vld [vmem:[%s7 + $0x8] sm:$0xf]
        %v1008 = vld [vmem:[%s7 + $0xc] sm:$0xf]
        %v1009 = vld [vmem:[%s8] sm:$0x1]
        %v1010 = vld [vmem:[%s9] sm:$0xf]
        %v1011 = vld [vmem:[%s9 + $0x4] sm:$0xf]
        %v1012 = vld [vmem:[%s9 + $0x8] sm:$0xf]
        %v1013 = vld [vmem:[%s9 + $0xc] sm:$0xf]
        %v1014 = vld [vmem:[%s9 + $0x10] sm:$0xf]
        %v1015 = vld [vmem:[%s9 + $0x14] sm:$0xf]
        %v1016 = vld [vmem:[%s9 + $0x18] sm:$0xf]
        %v1017 = vld [vmem:[%s9 + $0x1c] sm:$0xf]
        %v1018 = vld [vmem:[%s9 + $0x20] sm:$0xf]
        %v1019 = vld [vmem:[%s9 + $0x24] sm:$0xf]
        %v1020 = vld [vmem:[%s9 + $0x28] sm:$0xf]
        %v1021 = vld [vmem:[%s9 + $0x2c] sm:$0xf]
        %v1022 = vld [vmem:[%s10] sm:$0x1]
        %v1023 = vpack.c.bf16 %v1004, %v1003
        %1024 = vmatprep.subr.bf16.mxu0 0
        %1025 = vmatpush1.bf16.msra.mxu0 %v1023
        %1026 = vmatprep.subr.bf16.mxu0 0
        %1027 = vmatpush1.bf16.msra.mxu0 0
        %1028 = vmatprep.subr.bf16.mxu0 0
        %1029 = vmatpush1.bf16.msra.mxu0 0
        %1030 = vmatprep.subr.bf16.mxu0 0
        %1031 = vmatpush1.bf16.msra.mxu0 0
        %1032 = vmatprep.subr.bf16.mxu0 0
        %1033 = vmatpush1.bf16.msra.mxu0 0
        %1034 = vmatprep.subr.bf16.mxu0 0
        %1035 = vmatpush1.bf16.msra.mxu0 0
        %1036 = vmatprep.subr.bf16.mxu0 0
        %1037 = vmatpush1.bf16.msra.mxu0 0
        %1038 = vmatprep.subr.bf16.mxu0 0
        %1039 = vmatpush1.bf16.msra.mxu0 0
        %1040 = vmatprep.subr.bf16.mxu0 0
        %1041 = vmatpush1.bf16.msra.mxu0 0
        %1042 = vmatprep.subr.bf16.mxu0 0
        %1043 = vmatpush1.bf16.msra.mxu0 0
        %1044 = vmatprep.subr.bf16.mxu0 0
        %1045 = vmatpush1.bf16.msra.mxu0 0
        %1046 = vmatprep.subr.bf16.mxu0 0
        %1047 = vmatpush1.bf16.msra.mxu0 0
        %1048 = vmatprep.subr.bf16.mxu0 0
        %1049 = vmatpush1.bf16.msra.mxu0 0
        %1050 = vmatprep.subr.bf16.mxu0 0
        %1051 = vmatpush1.bf16.msra.mxu0 0
        %1052 = vmatprep.subr.bf16.mxu0 0
        %1053 = vmatpush1.bf16.msra.mxu0 0
        %1054 = vmatprep.subr.bf16.mxu0 0
        %1055 = vmatpush1.bf16.msra.mxu0 0
        %1056 = vmatprep.mubr.bf16.mxu0 0
        %1057 = vmatmul.mubr.bf16.gmra.mrb[0].mxu0 %v827
        %v1058 = vpop.f32.mrb[0].mxu0
        %v1059 = vadd.f32 0.0, %v1058
        %v1060 = vpop.f32.mrb[0].mxu0
        %v1061 = vpop.f32.mrb[0].mxu0
        %v1062 = vadd.f32 0.0, %v1061
        %v1063 = vpop.f32.mrb[0].mxu0
        %1064 = vdwg.mxu0
        %v1065 = vadd.f32 %v1003, %v1059
        %v1066 = vadd.f32 %v1004, %v1062
        %v1067 = vpack.c.bf16 %v1066, %v1065
        %v1069 = vlaneseq
        %v1070 = vshrl.u32 %v1069, 7
        %v1071 = vsub.s32 0, %v1070
        %v1072 = vrot.slane %v1009, %v1071
        %v1078 = vunpack.c.l.b16 %v1005
        %v1079 = vunpack.c.l.b16 %v1006
        %v1080 = vunpack.c.l.b16 %v1007
        %v1081 = vunpack.c.l.b16 %v1008
        %v1082 = vpack.c.b16 %v1079, %v1078
        %v1083 = vpack.c.b16 %v1081, %v1080
        %vm1086 = vcmask 261120
        %v1088 = vsel %vm1086, %v1067, 0
        %1090 = vmatprep.subr.bf16.mxu0 0
        %1091 = vmatpush1.bf16.msra.mxu0 %v1082
        %1092 = vmatprep.subr.bf16.mxu0 0
        %1093 = vmatpush1.bf16.msra.mxu0 %v1083
        %1094 = vmatprep.subr.bf16.mxu0 0
        %1095 = vmatpush1.bf16.msra.mxu0 0
        %1096 = vmatprep.subr.bf16.mxu0 0
        %1097 = vmatpush1.bf16.msra.mxu0 0
        %1098 = vmatprep.subr.bf16.mxu0 0
        %1099 = vmatpush1.bf16.msra.mxu0 0
        %1100 = vmatprep.subr.bf16.mxu0 0
        %1101 = vmatpush1.bf16.msra.mxu0 0
        %1102 = vmatprep.subr.bf16.mxu0 0
        %1103 = vmatpush1.bf16.msra.mxu0 0
        %1104 = vmatprep.subr.bf16.mxu0 0
        %1105 = vmatpush1.bf16.msra.mxu0 0
        %1106 = vmatprep.subr.bf16.mxu0 0
        %1107 = vmatpush1.bf16.msra.mxu0 0
        %1108 = vmatprep.subr.bf16.mxu0 0
        %1109 = vmatpush1.bf16.msra.mxu0 0
        %1110 = vmatprep.subr.bf16.mxu0 0
        %1111 = vmatpush1.bf16.msra.mxu0 0
        %1112 = vmatprep.subr.bf16.mxu0 0
        %1113 = vmatpush1.bf16.msra.mxu0 0
        %1114 = vmatprep.subr.bf16.mxu0 0
        %1115 = vmatpush1.bf16.msra.mxu0 0
        %1116 = vmatprep.subr.bf16.mxu0 0
        %1117 = vmatpush1.bf16.msra.mxu0 0
        %1118 = vmatprep.subr.bf16.mxu0 0
        %1119 = vmatpush1.bf16.msra.mxu0 0
        %1120 = vmatprep.subr.bf16.mxu0 0
        %1121 = vmatpush1.bf16.msra.mxu0 0
        %1122 = vmatprep.mubr.bf16.mxu0 0
        %1123 = vmatmul.mubr.bf16.gmra.mrb[0].mxu0 %v1088
        %v1124 = vpop.f32.mrb[0].mxu0
        %v1125 = vadd.f32 %v1072, %v1124
        %v1126 = vpop.f32.mrb[0].mxu0
        %v1127 = vpop.f32.mrb[0].mxu0
        %v1128 = vadd.f32 %v1072, %v1127
        %v1129 = vpop.f32.mrb[0].mxu0
        %1130 = vdwg.mxu0
        %v1131 = vmax.f32 %v1125, 0.0
        %v1132 = vmax.f32 %v1128, 0.0
        %v1133 = vpack.c.bf16 %v1132, %v1131
        %v1135 = vlaneseq
        %v1136 = vshrl.u32 %v1135, 7
        %v1137 = vsub.s32 0, %v1136
        %v1138 = vrot.slane %v1022, %v1137
        %v1152 = vunpack.c.l.b16 %v1010
        %v1153 = vunpack.c.l.b16 %v1011
        %v1154 = vunpack.c.l.b16 %v1012
        %v1155 = vunpack.c.l.b16 %v1013
        %v1156 = vunpack.c.l.b16 %v1014
        %v1157 = vunpack.c.l.b16 %v1015
        %v1158 = vunpack.c.l.b16 %v1016
        %v1159 = vunpack.c.l.b16 %v1017
        %v1160 = vunpack.c.l.b16 %v1018
        %v1161 = vunpack.c.l.b16 %v1019
        %v1162 = vunpack.c.l.b16 %v1020
        %v1163 = vunpack.c.l.b16 %v1021
        %v1164 = vpack.c.b16 %v1153, %v1152
        %v1165 = vpack.c.b16 %v1155, %v1154
        %v1166 = vpack.c.b16 %v1157, %v1156
        %v1167 = vpack.c.b16 %v1159, %v1158
        %v1168 = vpack.c.b16 %v1161, %v1160
        %v1169 = vpack.c.b16 %v1163, %v1162
        %vm1176 = vcmask 785408
        %v1178 = vsel %vm1176, %v1133, 0
        %1180 = vmatprep.subr.bf16.mxu0 0
        %1181 = vmatpush1.bf16.msra.mxu0 %v1164
        %1182 = vmatprep.subr.bf16.mxu0 0
        %1183 = vmatpush1.bf16.msra.mxu0 %v1165
        %1184 = vmatprep.subr.bf16.mxu0 0
        %1185 = vmatpush1.bf16.msra.mxu0 %v1166
        %1186 = vmatprep.subr.bf16.mxu0 0
        %1187 = vmatpush1.bf16.msra.mxu0 %v1167
        %1188 = vmatprep.subr.bf16.mxu0 0
        %1189 = vmatpush1.bf16.msra.mxu0 %v1168
        %1190 = vmatprep.subr.bf16.mxu0 0
        %1191 = vmatpush1.bf16.msra.mxu0 %v1169
        %1192 = vmatprep.subr.bf16.mxu0 0
        %1193 = vmatpush1.bf16.msra.mxu0 0
        %1194 = vmatprep.subr.bf16.mxu0 0
        %1195 = vmatpush1.bf16.msra.mxu0 0
        %1196 = vmatprep.subr.bf16.mxu0 0
        %1197 = vmatpush1.bf16.msra.mxu0 0
        %1198 = vmatprep.subr.bf16.mxu0 0
        %1199 = vmatpush1.bf16.msra.mxu0 0
        %1200 = vmatprep.subr.bf16.mxu0 0
        %1201 = vmatpush1.bf16.msra.mxu0 0
        %1202 = vmatprep.subr.bf16.mxu0 0
        %1203 = vmatpush1.bf16.msra.mxu0 0
        %1204 = vmatprep.subr.bf16.mxu0 0
        %1205 = vmatpush1.bf16.msra.mxu0 0
        %1206 = vmatprep.subr.bf16.mxu0 0
        %1207 = vmatpush1.bf16.msra.mxu0 0
        %1208 = vmatprep.subr.bf16.mxu0 0
        %1209 = vmatpush1.bf16.msra.mxu0 0
        %1210 = vmatprep.subr.bf16.mxu0 0
        %1211 = vmatpush1.bf16.msra.mxu0 0
        %1212 = vmatprep.mubr.bf16.mxu0 0
        %1213 = vmatmul.mubr.bf16.gmra.mrb[0].mxu0 %v1178
        %v1214 = vpop.f32.mrb[0].mxu0
        %v1215 = vadd.f32 %v1138, %v1214
        %v1216 = vpop.f32.mrb[0].mxu0
        %v1217 = vpop.f32.mrb[0].mxu0
        %v1218 = vadd.f32 %v1138, %v1217
        %v1219 = vpop.f32.mrb[0].mxu0
        %1220 = vdwg.mxu0
        %v1221 = vmax.f32 %v1215, 0.0
        %v1222 = vmax.f32 %v1218, 0.0
        %v1223 = vtanh.pop %v1221
        %v1224 = vtanh.pop %v1222
        %v1225 = vld [vmem:[%s11] sm:$0xf]
        %v1226 = vld [vmem:[%s11 + $0x4] sm:$0xf]
        %v1227 = vld [vmem:[%s11 + $0x8] sm:$0xf]
        %v1228 = vld [vmem:[%s11 + $0xc] sm:$0xf]
        %v1229 = vld [vmem:[%s12] sm:$0x1]
        %v1230 = vld [vmem:[%s13] sm:$0xf]
        %v1231 = vld [vmem:[%s13 + $0x4] sm:$0xf]
        %v1232 = vld [vmem:[%s13 + $0x8] sm:$0xf]
        %v1233 = vld [vmem:[%s13 + $0xc] sm:$0xf]
        %v1234 = vld [vmem:[%s13 + $0x10] sm:$0xf]
        %v1235 = vld [vmem:[%s13 + $0x14] sm:$0xf]
        %v1236 = vld [vmem:[%s13 + $0x18] sm:$0xf]
        %v1237 = vld [vmem:[%s13 + $0x1c] sm:$0xf]
        %v1238 = vld [vmem:[%s13 + $0x20] sm:$0xf]
        %v1239 = vld [vmem:[%s13 + $0x24] sm:$0xf]
        %v1240 = vld [vmem:[%s13 + $0x28] sm:$0xf]
        %v1241 = vld [vmem:[%s13 + $0x2c] sm:$0xf]
        %v1242 = vld [vmem:[%s14] sm:$0x1]
        %v1243 = vpack.c.bf16 %v1224, %v1223
        %1244 = vmatprep.subr.bf16.mxu0 0
        %1245 = vmatpush1.bf16.msra.mxu0 %v1243
        %1246 = vmatprep.subr.bf16.mxu0 0
        %1247 = vmatpush1.bf16.msra.mxu0 0
        %1248 = vmatprep.subr.bf16.mxu0 0
        %1249 = vmatpush1.bf16.msra.mxu0 0
        %1250 = vmatprep.subr.bf16.mxu0 0
        %1251 = vmatpush1.bf16.msra.mxu0 0
        %1252 = vmatprep.subr.bf16.mxu0 0
        %1253 = vmatpush1.bf16.msra.mxu0 0
        %1254 = vmatprep.subr.bf16.mxu0 0
        %1255 = vmatpush1.bf16.msra.mxu0 0
        %1256 = vmatprep.subr.bf16.mxu0 0
        %1257 = vmatpush1.bf16.msra.mxu0 0
        %1258 = vmatprep.subr.bf16.mxu0 0
        %1259 = vmatpush1.bf16.msra.mxu0 0
        %1260 = vmatprep.subr.bf16.mxu0 0
        %1261 = vmatpush1.bf16.msra.mxu0 0
        %1262 = vmatprep.subr.bf16.mxu0 0
        %1263 = vmatpush1.bf16.msra.mxu0 0
        %1264 = vmatprep.subr.bf16.mxu0 0
        %1265 = vmatpush1.bf16.msra.mxu0 0
        %1266 = vmatprep.subr.bf16.mxu0 0
        %1267 = vmatpush1.bf16.msra.mxu0 0
        %1268 = vmatprep.subr.bf16.mxu0 0
        %1269 = vmatpush1.bf16.msra.mxu0 0
        %1270 = vmatprep.subr.bf16.mxu0 0
        %1271 = vmatpush1.bf16.msra.mxu0 0
        %1272 = vmatprep.subr.bf16.mxu0 0
        %1273 = vmatpush1.bf16.msra.mxu0 0
        %1274 = vmatprep.subr.bf16.mxu0 0
        %1275 = vmatpush1.bf16.msra.mxu0 0
        %1276 = vmatprep.mubr.bf16.mxu0 0
        %1277 = vmatmul.mubr.bf16.gmra.mrb[0].mxu0 %v827
        %v1278 = vpop.f32.mrb[0].mxu0
        %v1279 = vadd.f32 0.0, %v1278
        %v1280 = vpop.f32.mrb[0].mxu0
        %v1281 = vpop.f32.mrb[0].mxu0
        %v1282 = vadd.f32 0.0, %v1281
        %v1283 = vpop.f32.mrb[0].mxu0
        %1284 = vdwg.mxu0
        %v1285 = vadd.f32 %v1223, %v1279
        %v1286 = vadd.f32 %v1224, %v1282
        %v1287 = vpack.c.bf16 %v1286, %v1285
        %v1289 = vlaneseq
        %v1290 = vshrl.u32 %v1289, 7
        %v1291 = vsub.s32 0, %v1290
        %v1292 = vrot.slane %v1229, %v1291
        %v1298 = vunpack.c.l.b16 %v1225
        %v1299 = vunpack.c.l.b16 %v1226
        %v1300 = vunpack.c.l.b16 %v1227
        %v1301 = vunpack.c.l.b16 %v1228
        %v1302 = vpack.c.b16 %v1299, %v1298
        %v1303 = vpack.c.b16 %v1301, %v1300
        %v1307 = vsel %vm1086, %v1287, 0
        %1309 = vmatprep.subr.bf16.mxu0 0
        %1310 = vmatpush1.bf16.msra.mxu0 %v1302
        %1311 = vmatprep.subr.bf16.mxu0 0
        %1312 = vmatpush1.bf16.msra.mxu0 %v1303
        %1313 = vmatprep.subr.bf16.mxu0 0
        %1314 = vmatpush1.bf16.msra.mxu0 0
        %1315 = vmatprep.subr.bf16.mxu0 0
        %1316 = vmatpush1.bf16.msra.mxu0 0
        %1317 = vmatprep.subr.bf16.mxu0 0
        %1318 = vmatpush1.bf16.msra.mxu0 0
        %1319 = vmatprep.subr.bf16.mxu0 0
        %1320 = vmatpush1.bf16.msra.mxu0 0
        %1321 = vmatprep.subr.bf16.mxu0 0
        %1322 = vmatpush1.bf16.msra.mxu0 0
        %1323 = vmatprep.subr.bf16.mxu0 0
        %1324 = vmatpush1.bf16.msra.mxu0 0
        %1325 = vmatprep.subr.bf16.mxu0 0
        %1326 = vmatpush1.bf16.msra.mxu0 0
        %1327 = vmatprep.subr.bf16.mxu0 0
        %1328 = vmatpush1.bf16.msra.mxu0 0
        %1329 = vmatprep.subr.bf16.mxu0 0
        %1330 = vmatpush1.bf16.msra.mxu0 0
        %1331 = vmatprep.subr.bf16.mxu0 0
        %1332 = vmatpush1.bf16.msra.mxu0 0
        %1333 = vmatprep.subr.bf16.mxu0 0
        %1334 = vmatpush1.bf16.msra.mxu0 0
        %1335 = vmatprep.subr.bf16.mxu0 0
        %1336 = vmatpush1.bf16.msra.mxu0 0
        %1337 = vmatprep.subr.bf16.mxu0 0
        %1338 = vmatpush1.bf16.msra.mxu0 0
        %1339 = vmatprep.subr.bf16.mxu0 0
        %1340 = vmatpush1.bf16.msra.mxu0 0
        %1341 = vmatprep.mubr.bf16.mxu0 0
        %1342 = vmatmul.mubr.bf16.gmra.mrb[0].mxu0 %v1307
        %v1343 = vpop.f32.mrb[0].mxu0
        %v1344 = vadd.f32 %v1292, %v1343
        %v1345 = vpop.f32.mrb[0].mxu0
        %v1346 = vpop.f32.mrb[0].mxu0
        %v1347 = vadd.f32 %v1292, %v1346
        %v1348 = vpop.f32.mrb[0].mxu0
        %1349 = vdwg.mxu0
        %v1350 = vmax.f32 %v1344, 0.0
        %v1351 = vmax.f32 %v1347, 0.0
        %v1352 = vpack.c.bf16 %v1351, %v1350
        %v1354 = vlaneseq
        %v1355 = vshrl.u32 %v1354, 7
        %v1356 = vsub.s32 0, %v1355
        %v1357 = vrot.slane %v1242, %v1356
        %v1371 = vunpack.c.l.b16 %v1230
        %v1372 = vunpack.c.l.b16 %v1231
        %v1373 = vunpack.c.l.b16 %v1232
        %v1374 = vunpack.c.l.b16 %v1233
        %v1375 = vunpack.c.l.b16 %v1234
        %v1376 = vunpack.c.l.b16 %v1235
        %v1377 = vunpack.c.l.b16 %v1236
        %v1378 = vunpack.c.l.b16 %v1237
        %v1379 = vunpack.c.l.b16 %v1238
        %v1380 = vunpack.c.l.b16 %v1239
        %v1381 = vunpack.c.l.b16 %v1240
        %v1382 = vunpack.c.l.b16 %v1241
        %v1383 = vpack.c.b16 %v1372, %v1371
        %v1384 = vpack.c.b16 %v1374, %v1373
        %v1385 = vpack.c.b16 %v1376, %v1375
        %v1386 = vpack.c.b16 %v1378, %v1377
        %v1387 = vpack.c.b16 %v1380, %v1379
        %v1388 = vpack.c.b16 %v1382, %v1381
        %v1396 = vsel %vm1176, %v1352, 0
        %1398 = vmatprep.subr.bf16.mxu0 0
        %1399 = vmatpush1.bf16.msra.mxu0 %v1383
        %1400 = vmatprep.subr.bf16.mxu0 0
        %1401 = vmatpush1.bf16.msra.mxu0 %v1384
        %1402 = vmatprep.subr.bf16.mxu0 0
        %1403 = vmatpush1.bf16.msra.mxu0 %v1385
        %1404 = vmatprep.subr.bf16.mxu0 0
        %1405 = vmatpush1.bf16.msra.mxu0 %v1386
        %1406 = vmatprep.subr.bf16.mxu0 0
        %1407 = vmatpush1.bf16.msra.mxu0 %v1387
        %1408 = vmatprep.subr.bf16.mxu0 0
        %1409 = vmatpush1.bf16.msra.mxu0 %v1388
        %1410 = vmatprep.subr.bf16.mxu0 0
        %1411 = vmatpush1.bf16.msra.mxu0 0
        %1412 = vmatprep.subr.bf16.mxu0 0
        %1413 = vmatpush1.bf16.msra.mxu0 0
        %1414 = vmatprep.subr.bf16.mxu0 0
        %1415 = vmatpush1.bf16.msra.mxu0 0
        %1416 = vmatprep.subr.bf16.mxu0 0
        %1417 = vmatpush1.bf16.msra.mxu0 0
        %1418 = vmatprep.subr.bf16.mxu0 0
        %1419 = vmatpush1.bf16.msra.mxu0 0
        %1420 = vmatprep.subr.bf16.mxu0 0
        %1421 = vmatpush1.bf16.msra.mxu0 0
        %1422 = vmatprep.subr.bf16.mxu0 0
        %1423 = vmatpush1.bf16.msra.mxu0 0
        %1424 = vmatprep.subr.bf16.mxu0 0
        %1425 = vmatpush1.bf16.msra.mxu0 0
        %1426 = vmatprep.subr.bf16.mxu0 0
        %1427 = vmatpush1.bf16.msra.mxu0 0
        %1428 = vmatprep.subr.bf16.mxu0 0
        %1429 = vmatpush1.bf16.msra.mxu0 0
        %1430 = vmatprep.mubr.bf16.mxu0 0
        %1431 = vmatmul.mubr.bf16.gmra.mrb[0].mxu0 %v1396
        %v1432 = vpop.f32.mrb[0].mxu0
        %v1433 = vadd.f32 %v1357, %v1432
        %v1434 = vpop.f32.mrb[0].mxu0
        %v1435 = vpop.f32.mrb[0].mxu0
        %v1436 = vadd.f32 %v1357, %v1435
        %v1437 = vpop.f32.mrb[0].mxu0
        %1438 = vdwg.mxu0
        %v1439 = vmax.f32 %v1433, 0.0
        %v1440 = vmax.f32 %v1436, 0.0
        %v1441 = vtanh.pop %v1439
        %v1442 = vtanh.pop %v1440
        %v1443 = vld [vmem:[%s15] sm:$0xf]
        %v1444 = vld [vmem:[%s15 + $0x4] sm:$0xf]
        %v1445 = vld [vmem:[%s15 + $0x8] sm:$0xf]
        %v1446 = vld [vmem:[%s15 + $0xc] sm:$0xf]
        %v1447 = vld [vmem:[%s16] sm:$0x1]
        %v1448 = vld [vmem:[%s17] sm:$0xf]
        %v1449 = vld [vmem:[%s17 + $0x4] sm:$0xf]
        %v1450 = vld [vmem:[%s17 + $0x8] sm:$0xf]
        %v1451 = vld [vmem:[%s17 + $0xc] sm:$0xf]
        %v1452 = vld [vmem:[%s17 + $0x10] sm:$0xf]
        %v1453 = vld [vmem:[%s17 + $0x14] sm:$0xf]
        %v1454 = vld [vmem:[%s17 + $0x18] sm:$0xf]
        %v1455 = vld [vmem:[%s17 + $0x1c] sm:$0xf]
        %v1456 = vld [vmem:[%s17 + $0x20] sm:$0xf]
        %v1457 = vld [vmem:[%s17 + $0x24] sm:$0xf]
        %v1458 = vld [vmem:[%s17 + $0x28] sm:$0xf]
        %v1459 = vld [vmem:[%s17 + $0x2c] sm:$0xf]
        %v1460 = vld [vmem:[%s18] sm:$0x1]
        %v1461 = vpack.c.bf16 %v1442, %v1441
        %1462 = vmatprep.subr.bf16.mxu0 0
        %1463 = vmatpush1.bf16.msra.mxu0 %v1461
        %1464 = vmatprep.subr.bf16.mxu0 0
        %1465 = vmatpush1.bf16.msra.mxu0 0
        %1466 = vmatprep.subr.bf16.mxu0 0
        %1467 = vmatpush1.bf16.msra.mxu0 0
        %1468 = vmatprep.subr.bf16.mxu0 0
        %1469 = vmatpush1.bf16.msra.mxu0 0
        %1470 = vmatprep.subr.bf16.mxu0 0
        %1471 = vmatpush1.bf16.msra.mxu0 0
        %1472 = vmatprep.subr.bf16.mxu0 0
        %1473 = vmatpush1.bf16.msra.mxu0 0
        %1474 = vmatprep.subr.bf16.mxu0 0
        %1475 = vmatpush1.bf16.msra.mxu0 0
        %1476 = vmatprep.subr.bf16.mxu0 0
        %1477 = vmatpush1.bf16.msra.mxu0 0
        %1478 = vmatprep.subr.bf16.mxu0 0
        %1479 = vmatpush1.bf16.msra.mxu0 0
        %1480 = vmatprep.subr.bf16.mxu0 0
        %1481 = vmatpush1.bf16.msra.mxu0 0
        %1482 = vmatprep.subr.bf16.mxu0 0
        %1483 = vmatpush1.bf16.msra.mxu0 0
        %1484 = vmatprep.subr.bf16.mxu0 0
        %1485 = vmatpush1.bf16.msra.mxu0 0
        %1486 = vmatprep.subr.bf16.mxu0 0
        %1487 = vmatpush1.bf16.msra.mxu0 0
        %1488 = vmatprep.subr.bf16.mxu0 0
        %1489 = vmatpush1.bf16.msra.mxu0 0
        %1490 = vmatprep.subr.bf16.mxu0 0
        %1491 = vmatpush1.bf16.msra.mxu0 0
        %1492 = vmatprep.subr.bf16.mxu0 0
        %1493 = vmatpush1.bf16.msra.mxu0 0
        %1494 = vmatprep.mubr.bf16.mxu0 0
        %1495 = vmatmul.mubr.bf16.gmra.mrb[0].mxu0 %v827
        %v1496 = vpop.f32.mrb[0].mxu0
        %v1497 = vadd.f32 0.0, %v1496
        %v1498 = vpop.f32.mrb[0].mxu0
        %v1499 = vpop.f32.mrb[0].mxu0
        %v1500 = vadd.f32 0.0, %v1499
        %v1501 = vpop.f32.mrb[0].mxu0
        %1502 = vdwg.mxu0
        %v1503 = vadd.f32 %v1441, %v1497
        %v1504 = vadd.f32 %v1442, %v1500
        %v1505 = vpack.c.bf16 %v1504, %v1503
        %v1507 = vlaneseq
        %v1508 = vshrl.u32 %v1507, 7
        %v1509 = vsub.s32 0, %v1508
        %v1510 = vrot.slane %v1447, %v1509
        %v1516 = vunpack.c.l.b16 %v1443
        %v1517 = vunpack.c.l.b16 %v1444
        %v1518 = vunpack.c.l.b16 %v1445
        %v1519 = vunpack.c.l.b16 %v1446
        %v1520 = vpack.c.b16 %v1517, %v1516
        %v1521 = vpack.c.b16 %v1519, %v1518
        %v1525 = vsel %vm1086, %v1505, 0
        %1527 = vmatprep.subr.bf16.mxu0 0
        %1528 = vmatpush1.bf16.msra.mxu0 %v1520
        %1529 = vmatprep.subr.bf16.mxu0 0
        %1530 = vmatpush1.bf16.msra.mxu0 %v1521
        %1531 = vmatprep.subr.bf16.mxu0 0
        %1532 = vmatpush1.bf16.msra.mxu0 0
        %1533 = vmatprep.subr.bf16.mxu0 0
        %1534 = vmatpush1.bf16.msra.mxu0 0
        %1535 = vmatprep.subr.bf16.mxu0 0
        %1536 = vmatpush1.bf16.msra.mxu0 0
        %1537 = vmatprep.subr.bf16.mxu0 0
        %1538 = vmatpush1.bf16.msra.mxu0 0
        %1539 = vmatprep.subr.bf16.mxu0 0
        %1540 = vmatpush1.bf16.msra.mxu0 0
        %1541 = vmatprep.subr.bf16.mxu0 0
        %1542 = vmatpush1.bf16.msra.mxu0 0
        %1543 = vmatprep.subr.bf16.mxu0 0
        %1544 = vmatpush1.bf16.msra.mxu0 0
        %1545 = vmatprep.subr.bf16.mxu0 0
        %1546 = vmatpush1.bf16.msra.mxu0 0
        %1547 = vmatprep.subr.bf16.mxu0 0
        %1548 = vmatpush1.bf16.msra.mxu0 0
        %1549 = vmatprep.subr.bf16.mxu0 0
        %1550 = vmatpush1.bf16.msra.mxu0 0
        %1551 = vmatprep.subr.bf16.mxu0 0
        %1552 = vmatpush1.bf16.msra.mxu0 0
        %1553 = vmatprep.subr.bf16.mxu0 0
        %1554 = vmatpush1.bf16.msra.mxu0 0
        %1555 = vmatprep.subr.bf16.mxu0 0
        %1556 = vmatpush1.bf16.msra.mxu0 0
        %1557 = vmatprep.subr.bf16.mxu0 0
        %1558 = vmatpush1.bf16.msra.mxu0 0
        %1559 = vmatprep.mubr.bf16.mxu0 0
        %1560 = vmatmul.mubr.bf16.gmra.mrb[0].mxu0 %v1525
        %v1561 = vpop.f32.mrb[0].mxu0
        %v1562 = vadd.f32 %v1510, %v1561
        %v1563 = vpop.f32.mrb[0].mxu0
        %v1564 = vpop.f32.mrb[0].mxu0
        %v1565 = vadd.f32 %v1510, %v1564
        %v1566 = vpop.f32.mrb[0].mxu0
        %1567 = vdwg.mxu0
        %v1568 = vmax.f32 %v1562, 0.0
        %v1569 = vmax.f32 %v1565, 0.0
        %v1570 = vpack.c.bf16 %v1569, %v1568
        %v1572 = vlaneseq
        %v1573 = vshrl.u32 %v1572, 7
        %v1574 = vsub.s32 0, %v1573
        %v1575 = vrot.slane %v1460, %v1574
        %v1589 = vunpack.c.l.b16 %v1448
        %v1590 = vunpack.c.l.b16 %v1449
        %v1591 = vunpack.c.l.b16 %v1450
        %v1592 = vunpack.c.l.b16 %v1451
        %v1593 = vunpack.c.l.b16 %v1452
        %v1594 = vunpack.c.l.b16 %v1453
        %v1595 = vunpack.c.l.b16 %v1454
        %v1596 = vunpack.c.l.b16 %v1455
        %v1597 = vunpack.c.l.b16 %v1456
        %v1598 = vunpack.c.l.b16 %v1457
        %v1599 = vunpack.c.l.b16 %v1458
        %v1600 = vunpack.c.l.b16 %v1459
        %v1601 = vpack.c.b16 %v1590, %v1589
        %v1602 = vpack.c.b16 %v1592, %v1591
        %v1603 = vpack.c.b16 %v1594, %v1593
        %v1604 = vpack.c.b16 %v1596, %v1595
        %v1605 = vpack.c.b16 %v1598, %v1597
        %v1606 = vpack.c.b16 %v1600, %v1599
        %v1614 = vsel %vm1176, %v1570, 0
        %1616 = vmatprep.subr.bf16.mxu0 0
        %1617 = vmatpush1.bf16.msra.mxu0 %v1601
        %1618 = vmatprep.subr.bf16.mxu0 0
        %1619 = vmatpush1.bf16.msra.mxu0 %v1602
        %1620 = vmatprep.subr.bf16.mxu0 0
        %1621 = vmatpush1.bf16.msra.mxu0 %v1603
        %1622 = vmatprep.subr.bf16.mxu0 0
        %1623 = vmatpush1.bf16.msra.mxu0 %v1604
        %1624 = vmatprep.subr.bf16.mxu0 0
        %1625 = vmatpush1.bf16.msra.mxu0 %v1605
        %1626 = vmatprep.subr.bf16.mxu0 0
        %1627 = vmatpush1.bf16.msra.mxu0 %v1606
        %1628 = vmatprep.subr.bf16.mxu0 0
        %1629 = vmatpush1.bf16.msra.mxu0 0
        %1630 = vmatprep.subr.bf16.mxu0 0
        %1631 = vmatpush1.bf16.msra.mxu0 0
        %1632 = vmatprep.subr.bf16.mxu0 0
        %1633 = vmatpush1.bf16.msra.mxu0 0
        %1634 = vmatprep.subr.bf16.mxu0 0
        %1635 = vmatpush1.bf16.msra.mxu0 0
        %1636 = vmatprep.subr.bf16.mxu0 0
        %1637 = vmatpush1.bf16.msra.mxu0 0
        %1638 = vmatprep.subr.bf16.mxu0 0
        %1639 = vmatpush1.bf16.msra.mxu0 0
        %1640 = vmatprep.subr.bf16.mxu0 0
        %1641 = vmatpush1.bf16.msra.mxu0 0
        %1642 = vmatprep.subr.bf16.mxu0 0
        %1643 = vmatpush1.bf16.msra.mxu0 0
        %1644 = vmatprep.subr.bf16.mxu0 0
        %1645 = vmatpush1.bf16.msra.mxu0 0
        %1646 = vmatprep.subr.bf16.mxu0 0
        %1647 = vmatpush1.bf16.msra.mxu0 0
        %1648 = vmatprep.mubr.bf16.mxu0 0
        %1649 = vmatmul.mubr.bf16.gmra.mrb[0].mxu0 %v1614
        %v1650 = vpop.f32.mrb[0].mxu0
        %v1651 = vadd.f32 %v1575, %v1650
        %v1652 = vpop.f32.mrb[0].mxu0
        %v1653 = vpop.f32.mrb[0].mxu0
        %v1654 = vadd.f32 %v1575, %v1653
        %v1655 = vpop.f32.mrb[0].mxu0
        %1656 = vdwg.mxu0
        %v1657 = vmax.f32 %v1651, 0.0
        %v1658 = vmax.f32 %v1654, 0.0
        %v1659 = vtanh.pop %v1657
        %v1660 = vtanh.pop %v1658
        %vm1661 = vcmp.gt.f32.partialorder %v807, 0.5
        %vm1662 = vcmp.gt.f32.partialorder %v808, 0.5
        %v1663 = vsel %vm1661, 1, 0
        %v1664 = vsel %vm1662, 1, 0
        %1665 = vset.pattern.permute.xlu0 0
        %1666 = vperm.xlu0 %1665, %v1663
        %v1667 = vpop.permute.xlu0 %1666
        %1668 = vset.pattern.permute.xlu0 0
        %1669 = vperm.xlu0 %1668, %v1664
        %v1670 = vpop.permute.xlu0 %1669
        %vm1671 = vcmp.eq.s32.totalorder %v1667, 1
        %vm1672 = vcmp.eq.s32.totalorder %v1670, 1
        %v1673 = vsel %vm1671, %v1659, -1e+30
        %v1674 = vsel %vm1672, %v1660, -1e+30
        %v1675 = vsel %vm1086, %v1673, -inf
        %v1676 = vsel %vm1086, %v1674, -inf
        %v1677 = vmax.f32 %v1675, %v1676
        %v1678 = vrot.slane %v1677, 4
        %v1679 = vmax.f32 %v1677, %v1678
        %v1680 = vrot.slane %v1679, 2
        %v1681 = vmax.f32 %v1679, %v1680
        %v1682 = vrot.slane %v1681, 1
        %v1683 = vmax.f32 %v1681, %v1682
        %vm1684 = vcmask 7168
        %v1685 = vsel %vm1684, %v807, 0.0
        %v1686 = vsel %vm1684, %v808, 0.0
        %v1687 = vadd.f32 %v1685, %v1686
        %v1688 = vrot.slane %v1687, 4
        %v1689 = vadd.f32 %v1687, %v1688
        %v1690 = vrot.slane %v1689, 2
        %v1691 = vadd.f32 %v1689, %v1690
        %v1692 = vrot.slane %v1691, 1
        %v1693 = vadd.f32 %v1691, %v1692
        %vm1694 = vcmp.gt.f32.partialorder %v1693, 0.5
        %v1695 = vsel %vm1694, 1, 0
        %1696 = vset.pattern.permute.xlu0 0
        %1697 = vperm.xlu0 %1696, %v1695
        %v1698 = vpop.permute.xlu0 %1697
        %vm1699 = vcmp.eq.s32.totalorder %v1698, 1
        %v1700 = vsel %vm1699, %v1683, 0.0
        %v1701 = vld [vmem:[%s19] sm:$0xf]
        %v1702 = vld [vmem:[%s19 + $0x4] sm:$0xf]
        %v1703 = vld [vmem:[%s19 + $0x8] sm:$0xf]
        %v1704 = vld [vmem:[%s19 + $0xc] sm:$0xf]
        %v1705 = vld [vmem:[%s20] sm:$0x1]
        %v1706 = vld [vmem:[%s21] sm:$0xf]
        %v1707 = vld [vmem:[%s21 + $0x4] sm:$0xf]
        %v1708 = vld [vmem:[%s21 + $0x8] sm:$0xf]
        %v1709 = vld [vmem:[%s21 + $0xc] sm:$0xf]
        %v1710 = vld [vmem:[%s22] sm:$0x1]
        %v1711 = vld [vmem:[%s23] sm:$0xf]
        %v1712 = vld [vmem:[%s23 + $0x4] sm:$0xf]
        %v1713 = vld [vmem:[%s23 + $0x8] sm:$0xf]
        %v1714 = vld [vmem:[%s23 + $0xc] sm:$0xf]
        %v1715 = vld [vmem:[%s24] sm:$0x1]
        %v1716 = vpack.c.bf16 %v1700, %v1700
        %v1721 = vunpack.c.l.b16 %v1701
        %v1722 = vunpack.c.l.b16 %v1702
        %v1723 = vunpack.c.l.b16 %v1703
        %v1724 = vunpack.c.l.b16 %v1704
        %v1725 = vpack.c.b16 %v1722, %v1721
        %v1726 = vpack.c.b16 %v1724, %v1723
        %v1730 = vsel %vm1086, %v1716, 0
        %1732 = vmatprep.subr.bf16.mxu0 0
        %1733 = vmatpush1.bf16.msra.mxu0 %v1725
        %1734 = vmatprep.subr.bf16.mxu0 0
        %1735 = vmatpush1.bf16.msra.mxu0 %v1726
        %1736 = vmatprep.subr.bf16.mxu0 0
        %1737 = vmatpush1.bf16.msra.mxu0 0
        %1738 = vmatprep.subr.bf16.mxu0 0
        %1739 = vmatpush1.bf16.msra.mxu0 0
        %1740 = vmatprep.subr.bf16.mxu0 0
        %1741 = vmatpush1.bf16.msra.mxu0 0
        %1742 = vmatprep.subr.bf16.mxu0 0
        %1743 = vmatpush1.bf16.msra.mxu0 0
        %1744 = vmatprep.subr.bf16.mxu0 0
        %1745 = vmatpush1.bf16.msra.mxu0 0
        %1746 = vmatprep.subr.bf16.mxu0 0
        %1747 = vmatpush1.bf16.msra.mxu0 0
        %1748 = vmatprep.subr.bf16.mxu0 0
        %1749 = vmatpush1.bf16.msra.mxu0 0
        %1750 = vmatprep.subr.bf16.mxu0 0
        %1751 = vmatpush1.bf16.msra.mxu0 0
        %1752 = vmatprep.subr.bf16.mxu0 0
        %1753 = vmatpush1.bf16.msra.mxu0 0
        %1754 = vmatprep.subr.bf16.mxu0 0
        %1755 = vmatpush1.bf16.msra.mxu0 0
        %1756 = vmatprep.subr.bf16.mxu0 0
        %1757 = vmatpush1.bf16.msra.mxu0 0
        %1758 = vmatprep.subr.bf16.mxu0 0
        %1759 = vmatpush1.bf16.msra.mxu0 0
        %1760 = vmatprep.subr.bf16.mxu0 0
        %1761 = vmatpush1.bf16.msra.mxu0 0
        %1762 = vmatprep.subr.bf16.mxu0 0
        %1763 = vmatpush1.bf16.msra.mxu0 0
        %1764 = vmatprep.mubr.bf16.mxu0 0
        %1765 = vmatmul.mubr.bf16.gmra.mrb[0].mxu0 %v1730
        %v1766 = vpop.f32.mrb[0].mxu0
        %v1767 = vadd.f32 %v1705, %v1766
        %v1768 = vpop.f32.mrb[0].mxu0
        %v1769 = vpop.f32.mrb[0].mxu0
        %v1770 = vpop.f32.mrb[0].mxu0
        %1771 = vdwg.mxu0
        %vm1772 = vcmp.gt.f32.partialorder %v1767, 0.0
        %v1773 = vmul.f32 %v1767, 1.442695
        %v1774 = vpow.pop %v1773
        %v1775 = vsub.f32 %v1774, 1.0
        %v1776 = vsel %vm1772, %v1767, %v1775
        %v1777 = vpack.c.bf16 %v1776, %v1776
        %v1782 = vunpack.c.l.b16 %v1706
        %v1783 = vunpack.c.l.b16 %v1707
        %v1784 = vunpack.c.l.b16 %v1708
        %v1785 = vunpack.c.l.b16 %v1709
        %v1786 = vpack.c.b16 %v1783, %v1782
        %v1787 = vpack.c.b16 %v1785, %v1784
        %v1791 = vsel %vm1086, %v1777, 0
        %1793 = vmatprep.subr.bf16.mxu0 0
        %1794 = vmatpush1.bf16.msra.mxu0 %v1786
        %1795 = vmatprep.subr.bf16.mxu0 0
        %1796 = vmatpush1.bf16.msra.mxu0 %v1787
        %1797 = vmatprep.subr.bf16.mxu0 0
        %1798 = vmatpush1.bf16.msra.mxu0 0
        %1799 = vmatprep.subr.bf16.mxu0 0
        %1800 = vmatpush1.bf16.msra.mxu0 0
        %1801 = vmatprep.subr.bf16.mxu0 0
        %1802 = vmatpush1.bf16.msra.mxu0 0
        %1803 = vmatprep.subr.bf16.mxu0 0
        %1804 = vmatpush1.bf16.msra.mxu0 0
        %1805 = vmatprep.subr.bf16.mxu0 0
        %1806 = vmatpush1.bf16.msra.mxu0 0
        %1807 = vmatprep.subr.bf16.mxu0 0
        %1808 = vmatpush1.bf16.msra.mxu0 0
        %1809 = vmatprep.subr.bf16.mxu0 0
        %1810 = vmatpush1.bf16.msra.mxu0 0
        %1811 = vmatprep.subr.bf16.mxu0 0
        %1812 = vmatpush1.bf16.msra.mxu0 0
        %1813 = vmatprep.subr.bf16.mxu0 0
        %1814 = vmatpush1.bf16.msra.mxu0 0
        %1815 = vmatprep.subr.bf16.mxu0 0
        %1816 = vmatpush1.bf16.msra.mxu0 0
        %1817 = vmatprep.subr.bf16.mxu0 0
        %1818 = vmatpush1.bf16.msra.mxu0 0
        %1819 = vmatprep.subr.bf16.mxu0 0
        %1820 = vmatpush1.bf16.msra.mxu0 0
        %1821 = vmatprep.subr.bf16.mxu0 0
        %1822 = vmatpush1.bf16.msra.mxu0 0
        %1823 = vmatprep.subr.bf16.mxu0 0
        %1824 = vmatpush1.bf16.msra.mxu0 0
        %1825 = vmatprep.mubr.bf16.mxu0 0
        %1826 = vmatmul.mubr.bf16.gmra.mrb[0].mxu0 %v1791
        %v1827 = vpop.f32.mrb[0].mxu0
        %v1828 = vadd.f32 %v1710, %v1827
        %v1829 = vpop.f32.mrb[0].mxu0
        %v1830 = vpop.f32.mrb[0].mxu0
        %v1831 = vpop.f32.mrb[0].mxu0
        %1832 = vdwg.mxu0
        %vm1833 = vcmp.gt.f32.partialorder %v1828, 0.0
        %v1834 = vmul.f32 %v1828, 1.442695
        %v1835 = vpow.pop %v1834
        %v1836 = vsub.f32 %v1835, 1.0
        %v1837 = vsel %vm1833, %v1828, %v1836
        %v1838 = vpack.c.bf16 %v1837, %v1837
        %v1843 = vunpack.c.l.b16 %v1711
        %v1844 = vunpack.c.l.b16 %v1712
        %v1845 = vunpack.c.l.b16 %v1713
        %v1846 = vunpack.c.l.b16 %v1714
        %v1847 = vpack.c.b16 %v1844, %v1843
        %v1848 = vpack.c.b16 %v1846, %v1845
        %v1852 = vsel %vm1086, %v1838, 0
        %1854 = vmatprep.subr.bf16.mxu0 0
        %1855 = vmatpush1.bf16.msra.mxu0 %v1847
        %1856 = vmatprep.subr.bf16.mxu0 0
        %1857 = vmatpush1.bf16.msra.mxu0 %v1848
        %1858 = vmatprep.subr.bf16.mxu0 0
        %1859 = vmatpush1.bf16.msra.mxu0 0
        %1860 = vmatprep.subr.bf16.mxu0 0
        %1861 = vmatpush1.bf16.msra.mxu0 0
        %1862 = vmatprep.subr.bf16.mxu0 0
        %1863 = vmatpush1.bf16.msra.mxu0 0
        %1864 = vmatprep.subr.bf16.mxu0 0
        %1865 = vmatpush1.bf16.msra.mxu0 0
        %1866 = vmatprep.subr.bf16.mxu0 0
        %1867 = vmatpush1.bf16.msra.mxu0 0
        %1868 = vmatprep.subr.bf16.mxu0 0
        %1869 = vmatpush1.bf16.msra.mxu0 0
        %1870 = vmatprep.subr.bf16.mxu0 0
        %1871 = vmatpush1.bf16.msra.mxu0 0
        %1872 = vmatprep.subr.bf16.mxu0 0
        %1873 = vmatpush1.bf16.msra.mxu0 0
        %1874 = vmatprep.subr.bf16.mxu0 0
        %1875 = vmatpush1.bf16.msra.mxu0 0
        %1876 = vmatprep.subr.bf16.mxu0 0
        %1877 = vmatpush1.bf16.msra.mxu0 0
        %1878 = vmatprep.subr.bf16.mxu0 0
        %1879 = vmatpush1.bf16.msra.mxu0 0
        %1880 = vmatprep.subr.bf16.mxu0 0
        %1881 = vmatpush1.bf16.msra.mxu0 0
        %1882 = vmatprep.subr.bf16.mxu0 0
        %1883 = vmatpush1.bf16.msra.mxu0 0
        %1884 = vmatprep.subr.bf16.mxu0 0
        %1885 = vmatpush1.bf16.msra.mxu0 0
        %1886 = vmatprep.mubr.bf16.mxu0 0
        %1887 = vmatmul.mubr.bf16.gmra.mrb[0].mxu0 %v1852
        %v1888 = vpop.f32.mrb[0].mxu0
        %v1889 = vadd.f32 %v1715, %v1888
        %v1890 = vpop.f32.mrb[0].mxu0
        %v1891 = vpop.f32.mrb[0].mxu0
        %v1892 = vpop.f32.mrb[0].mxu0
        %1893 = vdwg.mxu0
        %vm1894 = vcmask 8192
        %v1895 = vsel %vm1894, %v1889, -inf
        %1896 = vmax.xlane.f32.xlu0 %v1895
        %v1897 = vpop.xlane.xlu0 %1896
        %v1898 = vsub.f32 %v1889, %v1897
        %v1899 = vmul.f32 %v1898, 1.442695
        %v1900 = vpow.pop %v1899
        %v1901 = vsel %vm1894, %v1900, 0.0
        %1902 = vadd.xlane.f32.xlu0 %v1901
        %v1903 = vpop.xlane.xlu0 %1902
        %v1904 = vlog2.pop %v1903
        %v1905 = vmul.f32 %v1904, 0.6931472
        %v1906 = vadd.f32 %v1897, %v1905
        %v1907 = vsub.f32 %v1889, %v1906
        %1908 = vst.msk [vmem:[%s786] sm:$0x1] %vm1894, %v1907
        %s1909 = sand.u32 %s587, 1
        %s1910 = scalar_lea.sflag [#allocation3], %s1909
        %s1911 = sand.u32 %s587, 1
        %s1912 = scalar_lea.vmem [#allocation2], %s1911
        // Predicated region
        $region121: #{tpu_custom_call.1} parent=119 // pred_check
          %p1913 = pneg %p597
        $region122: #{tpu_custom_call.1} parent=119 // pred_check_branch
          %1915 = sbr.rel (%p1913) target = $region124
        $region123: #{tpu_custom_call.1} parent=119 // pred_region
          %s1917 = ssub.s32 16, 16
          %1918 = vsyncadd %s1910, %s1917
          %s1919 = smul.addr %s39, 16
          %s1920 = scalar_lea.hbm %s25, %s1919
          %s1922 = sshll.u32 %s1912, 4
          %s1923 = int_to_ptr.vmem [resolvable:$true] %s1922
          %1925 = dma.vmem_to_hbm [thread:$0]  %s1923, 16, %s1920, %s1910
        $region124: #{tpu_custom_call.1} parent=119 // pred_fallthru
          _
      $region120: #{tpu_custom_call.1} parent=5 // pred_fallthru
        _
      %p1926 = scmp.le.s32.totalorder 2, %s34
      // Predicated region
      $region125: #{tpu_custom_call.1} parent=5 // pred_check
        %p1927 = pneg %p1926
      $region126: #{tpu_custom_call.1} parent=5 // pred_check_branch
        %1929 = sbr.rel (%p1927) target = $region128
      $region127: #{tpu_custom_call.1} parent=5 // pred_region
        %s1930 = ssub.s32 %s34, 2
        // Predicated region
        $region129: #{tpu_custom_call.1} parent=127 // pred_check
          %p1931 = pneg %p603
        $region130: #{tpu_custom_call.1} parent=127 // pred_check_branch
          %1933 = sbr.rel (%p1931) target = $region132
        $region131: #{tpu_custom_call.1} parent=127 // pred_region
          %s1934 = sand.u32 %s588, 1
          %s1935 = scalar_lea.sflag [#allocation3], %s1934
          %s1936 = sand.u32 %s588, 1
          %s1937 = scalar_lea.vmem [#allocation2], %s1936
          %1938 = dma.done %s1935, 16
        $region132: #{tpu_custom_call.1} parent=127 // pred_fallthru
          _
      $region128: #{tpu_custom_call.1} parent=5 // pred_fallthru
        _
    $region6: #{tpu_custom_call.1} parent=1 // loop_footer
      %s38 = sadd.s32 1, %s34
    $region7: #{tpu_custom_call.1} parent=1 // loop_footer_branch
      %33 = sbr.rel target = $region3
    $region8: #{tpu_custom_call.1} parent=1 // loop_exit
      _
    %1939 = vsyncpa [#allocation3], 1
    %s1940 = scalar_lea.sflag [#allocation3], 1
    %1941 = vsyncpa %s1940, 1

</llo_original>
